<compile_context>
chip_gen: v7x
topology: tpu7x:2x2x1
jax: 0.10.0
libtpu: 0.0.40
codegen_flags: <defaults>
</compile_context>

<pallas_src>
import functools
import math

import jax
import jax.numpy as jnp
from jax.experimental import pallas as pl
from jax.experimental.pallas import tpu as pltpu


# ----------------------------- kernel helpers ------------------------------

def _gelu(x):
    # BERT-pytorch GELU: 0.5*x*(1+tanh(sqrt(2/pi)*(x+0.044715*x^3)))
    return 0.5 * x * (1.0 + jnp.tanh(math.sqrt(2.0 / math.pi)
                                     * (x + 0.044715 * x * x * x)))


def _layernorm(z, g, b, eps=1e-6):
    # Matches the repo's LayerNorm: a*(x-mean)/(std+eps)+b with torch.std
    # (unbiased, ddof=1).  Intentionally NOT standard LayerNorm numerics.
    # Exact division (no approx reciprocal) on this path for parity.
    mean = jnp.mean(z, axis=-1, keepdims=True)
    d = z - mean
    var = jnp.sum(d * d, axis=-1, keepdims=True) / (z.shape[-1] - 1)
    return g * (d / (jnp.sqrt(var) + eps)) + b


# ------------------------------ Pallas kernels ------------------------------

def attention_kernel(x_ref, kvalid_ref,
                     wqkv_ref, bqkv_ref, wo_ref, bo_ref, g_ref, be_ref,
                     out_ref, *, n_heads):
    x = x_ref[0]                                   # (S, H) f32
    S, H = x.shape
    dk = H // n_heads

    # Additive key-padding bias: 0.0 for valid keys, -1e9 for pads (==
    # masked_fill(mask==0, -1e9) up to softmax equivalence).  Broadcasts over
    # heads and query rows; the (B, S, S) mask is never materialized.
    bias = (kvalid_ref[...] - 1.0) * 1e9           # (1, 1, S)

    # ---- x + MHA(LayerNorm(x)) ----
    xn = _layernorm(x, g_ref[...], be_ref[...]).astype(jnp.bfloat16)

    # Fused QKV projection: one MXU pass with a 3H-wide N.  1/sqrt(dk) is
    # folded into the Q columns of wqkv/bqkv host-side.
    qkv = (jnp.dot(xn, wqkv_ref[...], preferred_element_type=jnp.float32)
           + bqkv_ref[...])                        # (S, 3H) f32

    # Head split: single reshape + single leading-dim transpose per tensor.
    def heads(t):                                  # (S, H) -> (n_heads, S, dk)
        return jnp.transpose(t.reshape(S, n_heads, dk),
                             (1, 0, 2)).astype(jnp.bfloat16)

    qh = heads(qkv[:, :H])
    kh = heads(qkv[:, H:2 * H])
    vh = heads(qkv[:, 2 * H:])

    # Head-batched attention (no per-head Python loops).
    scores = jnp.einsum('nqd,nkd->nqk', qh, kh,
                        preferred_element_type=jnp.float32) + bias
    m = jnp.max(scores, axis=-1, keepdims=True)
    e = jnp.exp(scores - m)
    p = (e * pl.reciprocal(jnp.sum(e, axis=-1, keepdims=True), approx=True)
         ).astype(jnp.bfloat16)                    # softmax (EUP reciprocal)
    ctx = jnp.einsum('nqk,nkd->nqd', p, vh,
                     preferred_element_type=jnp.float32).astype(jnp.bfloat16)

    # Output projection: merge heads back to (S, H) once, then a single
    # H-deep MXU contraction (== concat(heads) @ W_o).
    ctx_f = jnp.transpose(ctx, (1, 0, 2)).reshape(S, H)
    attn = (jnp.dot(ctx_f, wo_ref[...], preferred_element_type=jnp.float32)
            + bo_ref[...])
    out_ref[0] = x + attn                          # dropout == identity (eval)


def ffn_kernel(x_ref, g_ref, be_ref, w1_ref, b1_ref, w2_ref, b2_ref, out_ref):
    x = x_ref[0]                                   # (ts, H) f32
    # ---- x + FFN(LayerNorm(x)) ----
    xn = _layernorm(x, g_ref[...], be_ref[...]).astype(jnp.bfloat16)
    h = (jnp.dot(xn, w1_ref[...], preferred_element_type=jnp.float32)
         + b1_ref[...])
    h = _gelu(h).astype(jnp.bfloat16)
    ff = (jnp.dot(h, w2_ref[...], preferred_element_type=jnp.float32)
          + b2_ref[...])
    out_ref[0] = x + ff                            # trailing dropout == identity


# --------------------------- pallas_call wrappers ----------------------------

def _const_index_map(nd, grid_rank):
    if grid_rank == 1:
        def im(b):
            return (0,) * nd
    else:
        def im(b, s):
            return (0,) * nd
    return im


def _resident_specs(weights, grid_rank):
    # Whole weight resident every grid step (constant index_map -> no re-DMA).
    return [pl.BlockSpec(w.shape, _const_index_map(len(w.shape), grid_rank))
            for w in weights]


def _physical_vmem_bytes():
    # v5e/v6e: 128 MiB; v7x: 64 MiB per TensorCore.  Fall back to the smallest
    # (v7x) if the trace-time query is unavailable.
    try:
        return int(pltpu.get_tpu_info().vmem_capacity_bytes)
    except Exception:  # pragma: no cover
        return 64 << 20


def _vmem_limit(working_set_bytes):
    cap = (_physical_vmem_bytes() * 7) // 8        # headroom for Mosaic scratch
    need = int(working_set_bytes * 1.4)            # fudge for compiler temps
    return int(max(32 << 20, min(need, cap)))


def attention_sublayer(x, key_valid, p, n_heads):
    """x: (B, S, H) f32; key_valid: (B, 1, S) f32 (1.0 real token, 0.0 pad)."""
    B, S, H = x.shape
    weights = [p["wqkv"], p["bqkv"], p["wo"], p["bo"], p["g1"], p["be1"]]
    w_bytes = sum(int(w.size) * w.dtype.itemsize for w in weights)
    f32, bf16, nh = 4, 2, n_heads
    working = (2 * w_bytes                                   # dbl-buffered weights
               + 2 * (2 * S * H * f32 + S * f32)             # dbl-buffered x/out/kvalid
               + S * 3 * H * f32                             # qkv
               + 3 * S * H * bf16                            # qh/kh/vh
               + 2 * nh * S * S * f32 + nh * S * S * bf16    # scores, exp, p
               + S * H * (2 * bf16 + 2 * f32))               # xn, ctx, attn, residual
    return pl.pallas_call(
        functools.partial(attention_kernel, n_heads=n_heads),
        out_shape=jax.ShapeDtypeStruct((B, S, H), jnp.float32),
        grid=(B,),
        in_specs=[pl.BlockSpec((1, S, H), lambda b: (b, 0, 0)),
                  pl.BlockSpec((1, 1, S), lambda b: (b, 0, 0))]
                 + _resident_specs(weights, grid_rank=1),
        out_specs=pl.BlockSpec((1, S, H), lambda b: (b, 0, 0)),
        compiler_params=pltpu.CompilerParams(
            dimension_semantics=("parallel",),               # batch -> megacore
            vmem_limit_bytes=_vmem_limit(working)),
    )(x, key_valid, *weights)


def ffn_sublayer(x, p, seq_tile=256):
    B, S, H = x.shape
    ts = seq_tile if (S % seq_tile == 0) else S
    F = p["w1"].shape[1]
    weights = [p["g2"], p["be2"], p["w1"], p["bf1"], p["w2"], p["bf2"]]
    w_bytes = sum(int(w.size) * w.dtype.itemsize for w in weights)
    f32, bf16 = 4, 2
    working = (2 * w_bytes
               + 2 * (2 * ts * H * f32)                      # dbl-buffered x/out
               + ts * H * bf16 + ts * F * (f32 + bf16) + ts * H * f32)
    return pl.pallas_call(
        ffn_kernel,
        out_shape=jax.ShapeDtypeStruct((B, S, H), jnp.float32),
        grid=(B, S // ts),
        in_specs=[pl.BlockSpec((1, ts, H), lambda b, s: (b, s, 0))]
                 + _resident_specs(weights, grid_rank=2),
        out_specs=pl.BlockSpec((1, ts, H), lambda b, s: (b, s, 0)),
        compiler_params=pltpu.CompilerParams(
            dimension_semantics=("parallel", "parallel"),
            vmem_limit_bytes=_vmem_limit(working)),
    )(x, *weights)


def transformer_block(x, key_valid, p, n_heads):
    x = attention_sublayer(x, key_valid, p, n_heads)
    return ffn_sublayer(x, p)


# ------------------------- parameter construction ---------------------------

def init_bert_params(key, vocab_size, hidden, n_layers, n_heads, max_len):
    ff = hidden * 4
    dk = hidden // n_heads
    scale = 1.0 / math.sqrt(dk)
    keys = jax.random.split(key, 2 + n_layers)
    tok = jax.random.normal(keys[0], (vocab_size, hidden), jnp.float32) * 0.02
    tok = tok.at[0].set(0.0)                      # padding_idx=0
    seg = jax.random.normal(keys[1], (3, hidden), jnp.float32) * 0.02
    seg = seg.at[0].set(0.0)                      # padding_idx=0
    # sinusoidal positional table (fixed, non-learned)
    pos = jnp.arange(max_len, dtype=jnp.float32)[:, None]
    div = jnp.exp(jnp.arange(0, hidden, 2, dtype=jnp.float32)
                  * -(math.log(10000.0) / hidden))
    pe = jnp.zeros((max_len, hidden), jnp.float32)
    pe = pe.at[:, 0::2].set(jnp.sin(pos * div))
    pe = pe.at[:, 1::2].set(jnp.cos(pos * div))

    def lin(k, din, dout):
        return jax.random.normal(k, (din, dout), jnp.float32) * 0.02

    layers = []
    for i in range(n_layers):
        lk = jax.random.split(keys[2 + i], 6)
        wq, wk, wv = lin(lk[0], hidden, hidden), lin(lk[1], hidden, hidden), lin(lk[2], hidden, hidden)
        bq = jnp.zeros((hidden,), jnp.float32)
        bk = jnp.zeros((hidden,), jnp.float32)
        bv = jnp.zeros((hidden,), jnp.float32)
        # Fused QKV weight (H, 3H) bf16 with 1/sqrt(dk) folded into Q columns.
        # (When porting real PyTorch weights, fold them the same way.)
        wqkv = jnp.concatenate([wq * scale, wk, wv], axis=1).astype(jnp.bfloat16)
        bqkv = jnp.concatenate([bq * scale, bk, bv])[None, :]   # (1, 3H) f32
        layers.append(dict(
            wqkv=wqkv, bqkv=bqkv,
            wo=lin(lk[3], hidden, hidden).astype(jnp.bfloat16),
            bo=jnp.zeros((1, hidden), jnp.float32),
            g1=jnp.ones((1, hidden), jnp.float32), be1=jnp.zeros((1, hidden), jnp.float32),
            g2=jnp.ones((1, hidden), jnp.float32), be2=jnp.zeros((1, hidden), jnp.float32),
            w1=lin(lk[4], hidden, ff).astype(jnp.bfloat16),
            bf1=jnp.zeros((1, ff), jnp.float32),
            w2=lin(lk[5], ff, hidden).astype(jnp.bfloat16),
            bf2=jnp.zeros((1, hidden), jnp.float32),
        ))
    return dict(tok=tok, seg=seg, pe=pe, layers=layers)


def bert_forward(params, tokens, segments, n_heads):
    B, S = tokens.shape
    # Key validity (B, 1, S): 1.0 for real tokens, 0.0 for padding.  The full
    # (B, S, S) mask is never built -- each kernel expands it to an additive
    # bias on the fly.
    key_valid = (tokens > 0).astype(jnp.float32)[:, None, :]
    # embedding (token + position + segment); dropout == identity
    x = (params["tok"][tokens]
         + params["pe"][None, :S, :]
         + params["seg"][segments]).astype(jnp.float32)
    for lp in params["layers"]:
        x = transformer_block(x, key_valid, lp, n_heads)
    return x


# ---------------------------------- main ------------------------------------

if __name__ == "__main__":
    VOCAB, HIDDEN, N_LAYERS, N_HEADS = 30, 32, 2, 4
    B, S = 2, 8

    root = jax.random.PRNGKey(0)
    k_tok, k_seg, k_par = jax.random.split(root, 3)

    tokens = jax.random.randint(k_tok, (B, S), 1, VOCAB, dtype=jnp.int32)
    tokens = tokens.at[:, -2:].set(0)                 # some padding -> mask
    segments = jax.random.randint(k_seg, (B, S), 0, 3, dtype=jnp.int32)

    params = init_bert_params(k_par, VOCAB, HIDDEN, N_LAYERS, N_HEADS, max_len=S)

    out = bert_forward(params, tokens, segments, N_HEADS)
    out = jax.block_until_ready(out)
    assert out.shape == (B, S, HIDDEN) and out.dtype == jnp.float32
    assert bool(jnp.all(jnp.isfinite(out)))
    print("KERNEL_OK")
</pallas_src>

<mosaic_0001>
module attributes {stable_mosaic.version = 11 : i64} {
  func.func @attention_kernel(%arg0: i32, %arg1: memref<1x8x32xf32, #tpu.memory_space<vmem>>, %arg2: memref<1x1x8xf32, #tpu.memory_space<vmem>>, %arg3: memref<32x96xbf16, #tpu.memory_space<vmem>>, %arg4: memref<1x96xf32, #tpu.memory_space<vmem>>, %arg5: memref<32x32xbf16, #tpu.memory_space<vmem>>, %arg6: memref<1x32xf32, #tpu.memory_space<vmem>>, %arg7: memref<1x32xf32, #tpu.memory_space<vmem>>, %arg8: memref<1x32xf32, #tpu.memory_space<vmem>>, %arg9: memref<1x8x32xf32, #tpu.memory_space<vmem>>) attributes {dimension_semantics = [#tpu.dimension_semantics<parallel>], iteration_bounds = array<i64: 2>, scalar_prefetch = 0 : i64, scratch_operands = 0 : i64, tpu.core_type = #tpu.core_type<tc>, window_params = [{transform_indices = @transform_0, window_bounds = array<i64: 1, 8, 32>}, {transform_indices = @transform_1, window_bounds = array<i64: 1, 1, 8>}, {pipeline_mode = #tpu.pipeline_mode<synchronous>, transform_indices = @transform_2, window_bounds = array<i64: 32, 96>}, {pipeline_mode = #tpu.pipeline_mode<synchronous>, transform_indices = @transform_3, window_bounds = array<i64: 1, 96>}, {pipeline_mode = #tpu.pipeline_mode<synchronous>, transform_indices = @transform_4, window_bounds = array<i64: 32, 32>}, {pipeline_mode = #tpu.pipeline_mode<synchronous>, transform_indices = @transform_5, window_bounds = array<i64: 1, 32>}, {pipeline_mode = #tpu.pipeline_mode<synchronous>, transform_indices = @transform_6, window_bounds = array<i64: 1, 32>}, {pipeline_mode = #tpu.pipeline_mode<synchronous>, transform_indices = @transform_7, window_bounds = array<i64: 1, 32>}, {transform_indices = @transform_8, window_bounds = array<i64: 1, 8, 32>}]} {
    %c0 = arith.constant 0 : index
    %c0_0 = arith.constant 0 : index
    %c0_1 = arith.constant 0 : index
    %0 = vector.load %arg1[%c0, %c0_0, %c0_1] : memref<1x8x32xf32, #tpu.memory_space<vmem>>, vector<1x8x32xf32>
    %1 = vector.shape_cast %0 : vector<1x8x32xf32> to vector<8x32xf32>
    %c0_2 = arith.constant 0 : index
    %c0_3 = arith.constant 0 : index
    %c0_4 = arith.constant 0 : index
    %2 = vector.load %arg2[%c0_2, %c0_3, %c0_4] : memref<1x1x8xf32, #tpu.memory_space<vmem>>, vector<1x1x8xf32>
    %cst = arith.constant 1.000000e+00 : f32
    %3 = vector.broadcast %cst : f32 to vector<1x1x8xf32>
    %4 = arith.subf %2, %3 : vector<1x1x8xf32>
    %cst_5 = arith.constant 1.000000e+09 : f32
    %5 = vector.broadcast %cst_5 : f32 to vector<1x1x8xf32>
    %6 = arith.mulf %4, %5 : vector<1x1x8xf32>
    %c0_6 = arith.constant 0 : index
    %c0_7 = arith.constant 0 : index
    %7 = vector.load %arg7[%c0_6, %c0_7] : memref<1x32xf32, #tpu.memory_space<vmem>>, vector<1x32xf32>
    %c0_8 = arith.constant 0 : index
    %c0_9 = arith.constant 0 : index
    %8 = vector.load %arg8[%c0_8, %c0_9] : memref<1x32xf32, #tpu.memory_space<vmem>>, vector<1x32xf32>
    %cst_10 = arith.constant dense<0.000000e+00> : vector<8xf32>
    %9 = vector.multi_reduction <add>, %1, %cst_10 [1] : vector<8x32xf32> to vector<8xf32>
    %10 = vector.shape_cast %9 : vector<8xf32> to vector<8x1xf32>
    %cst_11 = arith.constant 3.200000e+01 : f32
    %11 = vector.broadcast %cst_11 : f32 to vector<8x1xf32>
    %12 = arith.divf %10, %11 : vector<8x1xf32>
    %13 = vector.broadcast %12 : vector<8x1xf32> to vector<8x32xf32>
    %14 = arith.subf %1, %13 : vector<8x32xf32>
    %15 = arith.mulf %14, %14 : vector<8x32xf32>
    %cst_12 = arith.constant dense<0.000000e+00> : vector<8xf32>
    %16 = vector.multi_reduction <add>, %15, %cst_12 [1] : vector<8x32xf32> to vector<8xf32>
    %17 = vector.shape_cast %16 : vector<8xf32> to vector<8x1xf32>
    %cst_13 = arith.constant 3.100000e+01 : f32
    %18 = vector.broadcast %cst_13 : f32 to vector<8x1xf32>
    %19 = arith.divf %17, %18 : vector<8x1xf32>
    %20 = math.sqrt %19 : vector<8x1xf32>
    %cst_14 = arith.constant 9.99999997E-7 : f32
    %21 = vector.broadcast %cst_14 : f32 to vector<8x1xf32>
    %22 = arith.addf %20, %21 : vector<8x1xf32>
    %23 = vector.broadcast %22 : vector<8x1xf32> to vector<8x32xf32>
    %24 = arith.divf %14, %23 : vector<8x32xf32>
    %25 = vector.broadcast %7 : vector<1x32xf32> to vector<8x32xf32>
    %26 = arith.mulf %25, %24 : vector<8x32xf32>
    %27 = vector.broadcast %8 : vector<1x32xf32> to vector<8x32xf32>
    %28 = arith.addf %26, %27 : vector<8x32xf32>
    %29 = arith.truncf %28 : vector<8x32xf32> to vector<8x32xbf16>
    %c0_15 = arith.constant 0 : index
    %c0_16 = arith.constant 0 : index
    %30 = vector.load %arg3[%c0_15, %c0_16] : memref<32x96xbf16, #tpu.memory_space<vmem>>, vector<32x96xbf16>
    %cst_17 = arith.constant dense<0.000000e+00> : vector<8x96xf32>
    %31 = tpu.matmul %29, %30, %cst_17 {dimension_numbers = #tpu.dot_dimension_numbers<[1], [0], [0], [1], [0, 0, 1, 1], [], []>} : vector<8x32xbf16>, vector<32x96xbf16>, vector<8x96xf32> -> vector<8x96xf32>
    %c0_18 = arith.constant 0 : index
    %c0_19 = arith.constant 0 : index
    %32 = vector.load %arg4[%c0_18, %c0_19] : memref<1x96xf32, #tpu.memory_space<vmem>>, vector<1x96xf32>
    %33 = vector.broadcast %32 : vector<1x96xf32> to vector<8x96xf32>
    %34 = arith.addf %31, %33 : vector<8x96xf32>
    %35 = vector.extract_strided_slice %34 {offsets = [0, 0], sizes = [8, 32], strides = [1, 1]} : vector<8x96xf32> to vector<8x32xf32>
    %36 = vector.shape_cast %35 : vector<8x32xf32> to vector<8x4x8xf32>
    %37 = tpu.transpose %36, [1, 0, 2] : vector<8x4x8xf32> -> vector<4x8x8xf32>
    %38 = arith.truncf %37 : vector<4x8x8xf32> to vector<4x8x8xbf16>
    %39 = vector.extract_strided_slice %34 {offsets = [0, 32], sizes = [8, 32], strides = [1, 1]} : vector<8x96xf32> to vector<8x32xf32>
    %40 = vector.shape_cast %39 : vector<8x32xf32> to vector<8x4x8xf32>
    %41 = tpu.transpose %40, [1, 0, 2] : vector<8x4x8xf32> -> vector<4x8x8xf32>
    %42 = arith.truncf %41 : vector<4x8x8xf32> to vector<4x8x8xbf16>
    %43 = vector.extract_strided_slice %34 {offsets = [0, 64], sizes = [8, 32], strides = [1, 1]} : vector<8x96xf32> to vector<8x32xf32>
    %44 = vector.shape_cast %43 : vector<8x32xf32> to vector<8x4x8xf32>
    %45 = tpu.transpose %44, [1, 0, 2] : vector<8x4x8xf32> -> vector<4x8x8xf32>
    %46 = arith.truncf %45 : vector<4x8x8xf32> to vector<4x8x8xbf16>
    "tpu.trace_start"() <{level = 10 : i32, message = "nqd,nkd->nqk"}> : () -> ()
    %cst_20 = arith.constant dense<0.000000e+00> : vector<4x8x8xf32>
    %47 = tpu.matmul %38, %42, %cst_20 {dimension_numbers = #tpu.dot_dimension_numbers<[2], [2], [1], [1], [0, 0, 0, 1, 1, 1], [0], [0]>} : vector<4x8x8xbf16>, vector<4x8x8xbf16>, vector<4x8x8xf32> -> vector<4x8x8xf32>
    "tpu.trace_stop"() : () -> ()
    %48 = vector.broadcast %6 : vector<1x1x8xf32> to vector<4x8x8xf32>
    %49 = arith.addf %47, %48 : vector<4x8x8xf32>
    %cst_21 = arith.constant dense<0xFF800000> : vector<4x8xf32>
    %50 = vector.multi_reduction <maximumf>, %49, %cst_21 [2] : vector<4x8x8xf32> to vector<4x8xf32>
    %51 = vector.shape_cast %50 : vector<4x8xf32> to vector<4x8x1xf32>
    %52 = vector.broadcast %51 : vector<4x8x1xf32> to vector<4x8x8xf32>
    %53 = arith.subf %49, %52 : vector<4x8x8xf32>
    %54 = math.exp %53 : vector<4x8x8xf32>
    %cst_22 = arith.constant dense<0.000000e+00> : vector<4x8xf32>
    %55 = vector.multi_reduction <add>, %54, %cst_22 [2] : vector<4x8x8xf32> to vector<4x8xf32>
    %56 = vector.shape_cast %55 : vector<4x8xf32> to vector<4x8x1xf32>
    %57 = tpu.reciprocal %56 {approx = true} : vector<4x8x1xf32> -> vector<4x8x1xf32>
    %58 = vector.broadcast %57 : vector<4x8x1xf32> to vector<4x8x8xf32>
    %59 = arith.mulf %54, %58 : vector<4x8x8xf32>
    %60 = arith.truncf %59 : vector<4x8x8xf32> to vector<4x8x8xbf16>
    "tpu.trace_start"() <{level = 10 : i32, message = "nqk,nkd->nqd"}> : () -> ()
    %cst_23 = arith.constant dense<0.000000e+00> : vector<4x8x8xf32>
    %61 = tpu.matmul %60, %46, %cst_23 {dimension_numbers = #tpu.dot_dimension_numbers<[2], [1], [1], [2], [0, 0, 0, 1, 1, 2], [0], [0]>} : vector<4x8x8xbf16>, vector<4x8x8xbf16>, vector<4x8x8xf32> -> vector<4x8x8xf32>
    "tpu.trace_stop"() : () -> ()
    %62 = arith.truncf %61 : vector<4x8x8xf32> to vector<4x8x8xbf16>
    %63 = tpu.transpose %62, [1, 0, 2] : vector<4x8x8xbf16> -> vector<8x4x8xbf16>
    %64 = vector.shape_cast %63 : vector<8x4x8xbf16> to vector<8x32xbf16>
    %c0_24 = arith.constant 0 : index
    %c0_25 = arith.constant 0 : index
    %65 = vector.load %arg5[%c0_24, %c0_25] : memref<32x32xbf16, #tpu.memory_space<vmem>>, vector<32x32xbf16>
    %cst_26 = arith.constant dense<0.000000e+00> : vector<8x32xf32>
    %66 = tpu.matmul %64, %65, %cst_26 {dimension_numbers = #tpu.dot_dimension_numbers<[1], [0], [0], [1], [0, 0, 1, 1], [], []>} : vector<8x32xbf16>, vector<32x32xbf16>, vector<8x32xf32> -> vector<8x32xf32>
    %c0_27 = arith.constant 0 : index
    %c0_28 = arith.constant 0 : index
    %67 = vector.load %arg6[%c0_27, %c0_28] : memref<1x32xf32, #tpu.memory_space<vmem>>, vector<1x32xf32>
    %68 = vector.broadcast %67 : vector<1x32xf32> to vector<8x32xf32>
    %69 = arith.addf %66, %68 : vector<8x32xf32>
    %70 = arith.addf %1, %69 : vector<8x32xf32>
    %c0_29 = arith.constant 0 : index
    %c0_30 = arith.constant 0 : index
    %c0_31 = arith.constant 0 : index
    %71 = vector.load %arg9[%c0_29, %c0_30, %c0_31] : memref<1x8x32xf32, #tpu.memory_space<vmem>>, vector<1x8x32xf32>
    %72 = vector.shape_cast %71 : vector<1x8x32xf32> to vector<8x32xf32>
    %73 = vector.shape_cast %70 : vector<8x32xf32> to vector<1x8x32xf32>
    tpu.vector_store %arg9[%c0_29, %c0_30, %c0_31], %73 {strides = array<i32>} : memref<1x8x32xf32, #tpu.memory_space<vmem>>, vector<1x8x32xf32>,
    return
  }
  func.func @transform_0(%arg0: i32) -> (i32, i32, i32) {
    %c0_i32 = arith.constant 0 : i32
    %c0_i32_0 = arith.constant 0 : i32
    %c0_i32_1 = arith.constant 0 : i32
    return %arg0, %c0_i32, %c0_i32_0 : i32, i32, i32
  }
  func.func @transform_1(%arg0: i32) -> (i32, i32, i32) {
    %c0_i32 = arith.constant 0 : i32
    %c0_i32_0 = arith.constant 0 : i32
    %c0_i32_1 = arith.constant 0 : i32
    return %arg0, %c0_i32, %c0_i32_0 : i32, i32, i32
  }
  func.func @transform_2(%arg0: i32) -> (i32, i32) {
    %c0_i32 = arith.constant 0 : i32
    %c0_i32_0 = arith.constant 0 : i32
    %c0_i32_1 = arith.constant 0 : i32
    return %c0_i32, %c0_i32_0 : i32, i32
  }
  func.func @transform_3(%arg0: i32) -> (i32, i32) {
    %c0_i32 = arith.constant 0 : i32
    %c0_i32_0 = arith.constant 0 : i32
    %c0_i32_1 = arith.constant 0 : i32
    return %c0_i32, %c0_i32_0 : i32, i32
  }
  func.func @transform_4(%arg0: i32) -> (i32, i32) {
    %c0_i32 = arith.constant 0 : i32
    %c0_i32_0 = arith.constant 0 : i32
    %c0_i32_1 = arith.constant 0 : i32
    return %c0_i32, %c0_i32_0 : i32, i32
  }
  func.func @transform_5(%arg0: i32) -> (i32, i32) {
    %c0_i32 = arith.constant 0 : i32
    %c0_i32_0 = arith.constant 0 : i32
    %c0_i32_1 = arith.constant 0 : i32
    return %c0_i32, %c0_i32_0 : i32, i32
  }
  func.func @transform_6(%arg0: i32) -> (i32, i32) {
    %c0_i32 = arith.constant 0 : i32
    %c0_i32_0 = arith.constant 0 : i32
    %c0_i32_1 = arith.constant 0 : i32
    return %c0_i32, %c0_i32_0 : i32, i32
  }
  func.func @transform_7(%arg0: i32) -> (i32, i32) {
    %c0_i32 = arith.constant 0 : i32
    %c0_i32_0 = arith.constant 0 : i32
    %c0_i32_1 = arith.constant 0 : i32
    return %c0_i32, %c0_i32_0 : i32, i32
  }
  func.func @transform_8(%arg0: i32) -> (i32, i32, i32) {
    %c0_i32 = arith.constant 0 : i32
    %c0_i32_0 = arith.constant 0 : i32
    %c0_i32_1 = arith.constant 0 : i32
    return %arg0, %c0_i32, %c0_i32_0 : i32, i32, i32
  }
}

</mosaic_0001>

<llo_original>
// kernel: tpu_custom_call.1
$region0: #{tpu_custom_call.1}
  #allocation0 [shape = 'u32[]', space=smem, size = 0x4, offset = 0x4, fixed_abs, tag = 'smem constant byte address 0x4 - core index']
  #allocation1 [shape = 'u32[144,128]{1,0:T(1,128)}', space=vmem, size = 0x12000, scoped, tag = 'internal scratch']
  %s0 = inlined_call_operand.hbm [shape: f32[2,8,32], index: 0, kind: input, shape index: {}]
  %s1 = inlined_call_operand.vmem [shape: f32[2,1,8], index: 1, kind: input, shape index: {}]
  %s2 = inlined_call_operand.hbm [shape: bf16[32,96], index: 2, kind: input, shape index: {}]
  %s3 = inlined_call_operand.vmem [shape: f32[1,96], index: 3, kind: input, shape index: {}]
  %s4 = inlined_call_operand.hbm [shape: bf16[32,32], index: 4, kind: input, shape index: {}]
  %s5 = inlined_call_operand.vmem [shape: f32[1,32], index: 5, kind: input, shape index: {}]
  %s6 = inlined_call_operand.vmem [shape: f32[1,32], index: 6, kind: input, shape index: {}]
  %s7 = inlined_call_operand.vmem [shape: f32[1,32], index: 7, kind: input, shape index: {}]
  %s8 = inlined_call_operand.hbm [shape: f32[2,8,32], index: 8, kind: output, shape index: {}]
  %s9 = sld [smem:[#allocation0]]
  $region77: #{tpu_custom_call.1} parent=0
    _
  %s11 = ssub.s32 1, %s9
  %s12 = scalar_select 0, %s11, %s9
  $region1: #{tpu_custom_call.1} parent=0
    #allocation2 [shape = 'u8[8192]{0}', space=vmem, size = 0x2000, scoped, tag = 'input window, operand 0']
    #allocation3 [shape = 's32[2]{0}', space=sflag, size = 0x8, scoped, tag = 'scoped memory for tpu_custom_call.1']
    #allocation4 [shape = 's32[2]{0}', space=sflag, size = 0x8, scoped, tag = 'scoped memory for tpu_custom_call.1']
    #allocation5 [shape = 'u8[8192]{0}', space=vmem, size = 0x2000, scoped, tag = 'input window, operand 2, single buffered']
    #allocation6 [shape = 's32[1]{0}', space=sflag, size = 0x4, scoped, tag = 'scoped memory for tpu_custom_call.1']
    #allocation7 [shape = 'u8[8192]{0}', space=vmem, size = 0x2000, scoped, tag = 'input window, operand 4, single buffered']
    #allocation8 [shape = 'u8[8192]{0}', space=vmem, size = 0x2000, scoped, tag = 'output window, operand 0']
    %13 = vsyncpa [#allocation3], 0
    %s14 = scalar_lea.sflag [#allocation3], 1
    %15 = vsyncpa %s14, 0
    %16 = vsyncpa [#allocation6], 0
    %17 = vsyncpa [#allocation4], 0
    %s18 = scalar_lea.sflag [#allocation4], 1
    %19 = vsyncpa %s18, 0
    loop: start=0, step=1, limit=4
    $region2: #{tpu_custom_call.1} parent=1 // loop_pre_header
      _
    $region3: #{tpu_custom_call.1} parent=1 // loop_header
      %s21 = sphi 0, %s25
      %p22 = scmp.ge.s32.totalorder %s21, 4
      %s31 = sphi 0, %s33
      %s34 = sphi 0, %s31
      %s35 = sphi 0, %s34
      %s51 = sphi 0, %s35
      %s57 = sphi 0, %s59
      %s60 = sphi 0, %s57
      %s61 = sphi 0, %s60
      %s77 = sphi 0, %s61
      %s81 = sphi 0, %s81
      %s83 = sphi 0, %s81
      %s84 = sphi 0, %s83
      %s98 = sphi 0, %s84
      %s102 = sphi 0, %s102
      %s104 = sphi 0, %s102
      %s105 = sphi 0, %s104
      %s119 = sphi 0, %s105
      %s123 = sphi 0, %s123
      %s125 = sphi 0, %s123
      %s126 = sphi 0, %s125
      %s140 = sphi 0, %s126
      %s144 = sphi 0, %s144
      %s146 = sphi 0, %s144
      %s147 = sphi 0, %s146
      %s161 = sphi 0, %s147
      %s165 = sphi 0, %s165
      %s167 = sphi 0, %s165
      %s168 = sphi 0, %s167
      %s182 = sphi 0, %s168
      %s186 = sphi 0, %s186
      %s188 = sphi 0, %s186
      %s189 = sphi 0, %s188
      %s203 = sphi 0, %s189
      %s209 = sphi 0, %s211
      %s212 = sphi 0, %s209
      %s213 = sphi 0, %s212
      %s229 = sphi 0, %s213
    $region4: #{tpu_custom_call.1} parent=1 // loop_header_branch
      %24 = sbr.rel (%p22) target = $region8
    $region5: #{tpu_custom_call.1} parent=1 // loop_body
      %s26 = ssub.s32 %s21, 1
      %s27 = ssub.s32 %s21, 2
      %s28 = sadd.s32 %s21, 1
      %s29 = ssub.s32 %s21, %s28
      %p30 = scmp.eq.s32.totalorder %s29, 0
      %s32 = sadd.s32 %s31, 1
      %s33 = scalar_select %p30, %s31, %s32
      %p36 = pneg %p30
      %p37 = scmp.eq.s32.totalorder %s21, 1
      %p38 = por %p36, %p37
      %p39 = scmp.ne.s32.totalorder %s31, %s34
      %p40 = scmp.eq.s32.totalorder %s21, 0
      %p41 = por %p39, %p40
      %p42 = scmp.ne.s32.totalorder %s31, %s34
      %p43 = scmp.eq.s32.totalorder %s26, 1
      %p44 = por %p42, %p43
      %p45 = scmp.ne.s32.totalorder %s34, %s35
      %p46 = scmp.eq.s32.totalorder %s26, 0
      %p47 = por %p45, %p46
      %p48 = scmp.ne.s32.totalorder %s34, %s35
      %p49 = scmp.eq.s32.totalorder %s27, 1
      %p50 = por %p48, %p49
      %p52 = scmp.ne.s32.totalorder %s35, %s51
      %p53 = scmp.eq.s32.totalorder %s27, 0
      %p54 = por %p52, %p53
      %s55 = ssub.s32 %s21, %s28
      %p56 = scmp.eq.s32.totalorder %s55, 0
      %s58 = sadd.s32 %s57, 1
      %s59 = scalar_select %p56, %s57, %s58
      %p62 = pneg %p56
      %p63 = scmp.eq.s32.totalorder %s21, 1
      %p64 = por %p62, %p63
      %p65 = scmp.ne.s32.totalorder %s57, %s60
      %p66 = scmp.eq.s32.totalorder %s21, 0
      %p67 = por %p65, %p66
      %p68 = scmp.ne.s32.totalorder %s57, %s60
      %p69 = scmp.eq.s32.totalorder %s26, 1
      %p70 = por %p68, %p69
      %p71 = scmp.ne.s32.totalorder %s60, %s61
      %p72 = scmp.eq.s32.totalorder %s26, 0
      %p73 = por %p71, %p72
      %p74 = scmp.ne.s32.totalorder %s60, %s61
      %p75 = scmp.eq.s32.totalorder %s27, 1
      %p76 = por %p74, %p75
      %p78 = scmp.ne.s32.totalorder %s61, %s77
      %p79 = scmp.eq.s32.totalorder %s27, 0
      %p80 = por %p78, %p79
      %s82 = sadd.s32 %s81, 1
      %p85 = scmp.eq.s32.totalorder %s21, 1
      %p86 = scmp.ne.s32.totalorder %s81, %s83
      %p87 = scmp.eq.s32.totalorder %s21, 0
      %p88 = por %p86, %p87
      %p89 = scmp.ne.s32.totalorder %s81, %s83
      %p90 = scmp.eq.s32.totalorder %s26, 1
      %p91 = por %p89, %p90
      %p92 = scmp.ne.s32.totalorder %s83, %s84
      %p93 = scmp.eq.s32.totalorder %s26, 0
      %p94 = por %p92, %p93
      %p95 = scmp.ne.s32.totalorder %s83, %s84
      %p96 = scmp.eq.s32.totalorder %s27, 1
      %p97 = por %p95, %p96
      %p99 = scmp.ne.s32.totalorder %s84, %s98
      %p100 = scmp.eq.s32.totalorder %s27, 0
      %p101 = por %p99, %p100
      %s103 = sadd.s32 %s102, 1
      %p106 = scmp.eq.s32.totalorder %s21, 1
      %p107 = scmp.ne.s32.totalorder %s102, %s104
      %p108 = scmp.eq.s32.totalorder %s21, 0
      %p109 = por %p107, %p108
      %p110 = scmp.ne.s32.totalorder %s102, %s104
      %p111 = scmp.eq.s32.totalorder %s26, 1
      %p112 = por %p110, %p111
      %p113 = scmp.ne.s32.totalorder %s104, %s105
      %p114 = scmp.eq.s32.totalorder %s26, 0
      %p115 = por %p113, %p114
      %p116 = scmp.ne.s32.totalorder %s104, %s105
      %p117 = scmp.eq.s32.totalorder %s27, 1
      %p118 = por %p116, %p117
      %p120 = scmp.ne.s32.totalorder %s105, %s119
      %p121 = scmp.eq.s32.totalorder %s27, 0
      %p122 = por %p120, %p121
      %s124 = sadd.s32 %s123, 1
      %p127 = scmp.eq.s32.totalorder %s21, 1
      %p128 = scmp.ne.s32.totalorder %s123, %s125
      %p129 = scmp.eq.s32.totalorder %s21, 0
      %p130 = por %p128, %p129
      %p131 = scmp.ne.s32.totalorder %s123, %s125
      %p132 = scmp.eq.s32.totalorder %s26, 1
      %p133 = por %p131, %p132
      %p134 = scmp.ne.s32.totalorder %s125, %s126
      %p135 = scmp.eq.s32.totalorder %s26, 0
      %p136 = por %p134, %p135
      %p137 = scmp.ne.s32.totalorder %s125, %s126
      %p138 = scmp.eq.s32.totalorder %s27, 1
      %p139 = por %p137, %p138
      %p141 = scmp.ne.s32.totalorder %s126, %s140
      %p142 = scmp.eq.s32.totalorder %s27, 0
      %p143 = por %p141, %p142
      %s145 = sadd.s32 %s144, 1
      %p148 = scmp.eq.s32.totalorder %s21, 1
      %p149 = scmp.ne.s32.totalorder %s144, %s146
      %p150 = scmp.eq.s32.totalorder %s21, 0
      %p151 = por %p149, %p150
      %p152 = scmp.ne.s32.totalorder %s144, %s146
      %p153 = scmp.eq.s32.totalorder %s26, 1
      %p154 = por %p152, %p153
      %p155 = scmp.ne.s32.totalorder %s146, %s147
      %p156 = scmp.eq.s32.totalorder %s26, 0
      %p157 = por %p155, %p156
      %p158 = scmp.ne.s32.totalorder %s146, %s147
      %p159 = scmp.eq.s32.totalorder %s27, 1
      %p160 = por %p158, %p159
      %p162 = scmp.ne.s32.totalorder %s147, %s161
      %p163 = scmp.eq.s32.totalorder %s27, 0
      %p164 = por %p162, %p163
      %s166 = sadd.s32 %s165, 1
      %p169 = scmp.eq.s32.totalorder %s21, 1
      %p170 = scmp.ne.s32.totalorder %s165, %s167
      %p171 = scmp.eq.s32.totalorder %s21, 0
      %p172 = por %p170, %p171
      %p173 = scmp.ne.s32.totalorder %s165, %s167
      %p174 = scmp.eq.s32.totalorder %s26, 1
      %p175 = por %p173, %p174
      %p176 = scmp.ne.s32.totalorder %s167, %s168
      %p177 = scmp.eq.s32.totalorder %s26, 0
      %p178 = por %p176, %p177
      %p179 = scmp.ne.s32.totalorder %s167, %s168
      %p180 = scmp.eq.s32.totalorder %s27, 1
      %p181 = por %p179, %p180
      %p183 = scmp.ne.s32.totalorder %s168, %s182
      %p184 = scmp.eq.s32.totalorder %s27, 0
      %p185 = por %p183, %p184
      %s187 = sadd.s32 %s186, 1
      %p190 = scmp.eq.s32.totalorder %s21, 1
      %p191 = scmp.ne.s32.totalorder %s186, %s188
      %p192 = scmp.eq.s32.totalorder %s21, 0
      %p193 = por %p191, %p192
      %p194 = scmp.ne.s32.totalorder %s186, %s188
      %p195 = scmp.eq.s32.totalorder %s26, 1
      %p196 = por %p194, %p195
      %p197 = scmp.ne.s32.totalorder %s188, %s189
      %p198 = scmp.eq.s32.totalorder %s26, 0
      %p199 = por %p197, %p198
      %p200 = scmp.ne.s32.totalorder %s188, %s189
      %p201 = scmp.eq.s32.totalorder %s27, 1
      %p202 = por %p200, %p201
      %p204 = scmp.ne.s32.totalorder %s189, %s203
      %p205 = scmp.eq.s32.totalorder %s27, 0
      %p206 = por %p204, %p205
      %s207 = ssub.s32 %s21, %s28
      %p208 = scmp.eq.s32.totalorder %s207, 0
      %s210 = sadd.s32 %s209, 1
      %s211 = scalar_select %p208, %s209, %s210
      %p214 = pneg %p208
      %p215 = scmp.eq.s32.totalorder %s21, 1
      %p216 = por %p214, %p215
      %p217 = scmp.ne.s32.totalorder %s209, %s212
      %p218 = scmp.eq.s32.totalorder %s21, 0
      %p219 = por %p217, %p218
      %p220 = scmp.ne.s32.totalorder %s209, %s212
      %p221 = scmp.eq.s32.totalorder %s26, 1
      %p222 = por %p220, %p221
      %p223 = scmp.ne.s32.totalorder %s212, %s213
      %p224 = scmp.eq.s32.totalorder %s26, 0
      %p225 = por %p223, %p224
      %p226 = scmp.ne.s32.totalorder %s212, %s213
      %p227 = scmp.eq.s32.totalorder %s27, 1
      %p228 = por %p226, %p227
      %p230 = scmp.ne.s32.totalorder %s213, %s229
      %p231 = scmp.eq.s32.totalorder %s27, 0
      %p232 = por %p230, %p231
      %p233 = scmp.le.s32.totalorder 1, %s21
      %p234 = scmp.lt.s32.totalorder %s21, 3
      %p235 = pnand %p233, %p234
      %p236 = pneg %p235
      // Predicated region
      $region9: #{tpu_custom_call.1} parent=5 // pred_check
        _
      $region10: #{tpu_custom_call.1} parent=5 // pred_check_branch
        %238 = sbr.rel (%p235) target = $region12
      $region11: #{tpu_custom_call.1} parent=5 // pred_region
        %s239 = ssub.s32 %s21, 1
        // Predicated region
        $region13: #{tpu_custom_call.1} parent=11 // pred_check
          %p240 = pneg %p94
        $region14: #{tpu_custom_call.1} parent=11 // pred_check_branch
          %242 = sbr.rel (%p240) target = $region16
        $region15: #{tpu_custom_call.1} parent=11 // pred_region
          %s244 = ssub.s32 256, 256
          %245 = vsyncadd [#allocation6], %s244
          %s246 = sshll.u32 [#allocation5], 4
          %s247 = int_to_ptr.vmem [resolvable:$true] %s246
          %252 = dma.hbm_to_vmem [thread:$0]  %s2, 256, %s247, [#allocation6], 64, 64, 4
        $region16: #{tpu_custom_call.1} parent=11 // pred_fallthru
          _
        // Predicated region
        $region17: #{tpu_custom_call.1} parent=11 // pred_check
          %p253 = pneg %p115
        $region18: #{tpu_custom_call.1} parent=11 // pred_check_branch
          %255 = sbr.rel (%p253) target = $region20
        $region19: #{tpu_custom_call.1} parent=11 // pred_region
          _
        $region20: #{tpu_custom_call.1} parent=11 // pred_fallthru
          _
        // Predicated region
        $region21: #{tpu_custom_call.1} parent=11 // pred_check
          %p256 = pneg %p136
        $region22: #{tpu_custom_call.1} parent=11 // pred_check_branch
          %258 = sbr.rel (%p256) target = $region24
        $region23: #{tpu_custom_call.1} parent=11 // pred_region
          %s260 = ssub.s32 256, 256
          %261 = vsyncadd [#allocation6], %s260
          %s262 = sshll.u32 [#allocation7], 4
          %s263 = int_to_ptr.vmem [resolvable:$true] %s262
          %268 = dma.hbm_to_vmem [thread:$0]  %s4, 256, %s263, [#allocation6], 64, 64, 4
        $region24: #{tpu_custom_call.1} parent=11 // pred_fallthru
          _
        // Predicated region
        $region25: #{tpu_custom_call.1} parent=11 // pred_check
          %p269 = pneg %p157
        $region26: #{tpu_custom_call.1} parent=11 // pred_check_branch
          %271 = sbr.rel (%p269) target = $region28
        $region27: #{tpu_custom_call.1} parent=11 // pred_region
          _
        $region28: #{tpu_custom_call.1} parent=11 // pred_fallthru
          _
        // Predicated region
        $region29: #{tpu_custom_call.1} parent=11 // pred_check
          %p272 = pneg %p178
        $region30: #{tpu_custom_call.1} parent=11 // pred_check_branch
          %274 = sbr.rel (%p272) target = $region32
        $region31: #{tpu_custom_call.1} parent=11 // pred_region
          _
        $region32: #{tpu_custom_call.1} parent=11 // pred_fallthru
          _
        // Predicated region
        $region33: #{tpu_custom_call.1} parent=11 // pred_check
          %p275 = pneg %p199
        $region34: #{tpu_custom_call.1} parent=11 // pred_check_branch
          %277 = sbr.rel (%p275) target = $region36
        $region35: #{tpu_custom_call.1} parent=11 // pred_region
          _
        $region36: #{tpu_custom_call.1} parent=11 // pred_fallthru
          _
      $region12: #{tpu_custom_call.1} parent=5 // pred_fallthru
        _
      %p278 = scmp.lt.s32.totalorder %s21, 2
      // Predicated region
      $region37: #{tpu_custom_call.1} parent=5 // pred_check
        %p279 = pneg %p278
      $region38: #{tpu_custom_call.1} parent=5 // pred_check_branch
        %281 = sbr.rel (%p279) target = $region40
      $region39: #{tpu_custom_call.1} parent=5 // pred_region
        // Predicated region
        $region41: #{tpu_custom_call.1} parent=39 // pred_check
          %p282 = pneg %p41
        $region42: #{tpu_custom_call.1} parent=39 // pred_check_branch
          %284 = sbr.rel (%p282) target = $region44
        $region43: #{tpu_custom_call.1} parent=39 // pred_region
          %s285 = sand.u32 %s31, 1
          %s286 = scalar_lea.sflag [#allocation3], %s285
          %s287 = sand.u32 %s31, 1
          %s288 = smul.addr %s287, 8
          %s289 = scalar_lea.vmem [#allocation2], %s288
          %s291 = ssub.s32 128, 128
          %292 = vsyncadd %s286, %s291
          %s293 = smul.addr %s21, 128
          %s294 = scalar_lea.hbm %s0, %s293
          %s296 = sshll.u32 %s289, 4
          %s297 = int_to_ptr.vmem [resolvable:$true] %s296
          %299 = dma.hbm_to_vmem [thread:$0]  %s294, 128, %s297, %s286
        $region44: #{tpu_custom_call.1} parent=39 // pred_fallthru
          _
        // Predicated region
        $region45: #{tpu_custom_call.1} parent=39 // pred_check
          %p300 = pneg %p67
        $region46: #{tpu_custom_call.1} parent=39 // pred_check_branch
          %302 = sbr.rel (%p300) target = $region48
        $region47: #{tpu_custom_call.1} parent=39 // pred_region
          %p303 = scmp.lt.s32.totalorder %s21, 1
          %s304 = scalar_select %p303, %s21, 1
          %s305 = scalar_lea.vmem %s1, %s304
        $region48: #{tpu_custom_call.1} parent=39 // pred_fallthru
          _
      $region40: #{tpu_custom_call.1} parent=5 // pred_fallthru
        _
      %p306 = scmp.le.s32.totalorder 1, %s21
      %p307 = scmp.lt.s32.totalorder %s21, 3
      %p308 = pnand %p306, %p307
      %p309 = pneg %p308
      // Predicated region
      $region49: #{tpu_custom_call.1} parent=5 // pred_check
        _
      $region50: #{tpu_custom_call.1} parent=5 // pred_check_branch
        %311 = sbr.rel (%p308) target = $region52
      $region51: #{tpu_custom_call.1} parent=5 // pred_region
        %s312 = ssub.s32 %s21, 1
        %s313 = sand.u32 %s34, 1
        %s314 = scalar_lea.sflag [#allocation3], %s313
        %s315 = sand.u32 %s34, 1
        %s316 = smul.addr %s315, 8
        %s317 = scalar_lea.vmem [#allocation2], %s316
        // Predicated region
        $region53: #{tpu_custom_call.1} parent=51 // pred_check
          %p318 = pneg %p47
        $region54: #{tpu_custom_call.1} parent=51 // pred_check_branch
          %320 = sbr.rel (%p318) target = $region56
        $region55: #{tpu_custom_call.1} parent=51 // pred_region
          %321 = dma.done %s314, 128
        $region56: #{tpu_custom_call.1} parent=51 // pred_fallthru
          _
        // Predicated region
        $region57: #{tpu_custom_call.1} parent=51 // pred_check
          %p322 = pneg %p94
        $region58: #{tpu_custom_call.1} parent=51 // pred_check_branch
          %324 = sbr.rel (%p322) target = $region60
        $region59: #{tpu_custom_call.1} parent=51 // pred_region
          %325 = dma.done [#allocation6], 256
        $region60: #{tpu_custom_call.1} parent=51 // pred_fallthru
          _
        // Predicated region
        $region61: #{tpu_custom_call.1} parent=51 // pred_check
          %p326 = pneg %p136
        $region62: #{tpu_custom_call.1} parent=51 // pred_check_branch
          %328 = sbr.rel (%p326) target = $region64
        $region63: #{tpu_custom_call.1} parent=51 // pred_region
          %329 = dma.done [#allocation6], 256
        $region64: #{tpu_custom_call.1} parent=51 // pred_fallthru
          _
        %s330 = sand.u32 %s34, 1
        %s331 = scalar_lea.sflag [#allocation3], %s330
        %s332 = sand.u32 %s34, 1
        %s333 = smul.addr %s332, 8
        %s334 = scalar_lea.vmem [#allocation2], %s333
        %p335 = pneg %p47
        %p336 = pneg %p44
        %p337 = scmp.lt.s32.totalorder %s26, 1
        %s338 = scalar_select %p337, %s26, 1
        %s339 = scalar_lea.vmem %s1, %s338
        %p340 = pneg %p73
        %p341 = pneg %p70
        %p342 = pneg %p94
        %p343 = pneg %p91
        %p344 = pneg %p115
        %p345 = pneg %p112
        %p346 = pneg %p136
        %p347 = pneg %p133
        %p348 = pneg %p157
        %p349 = pneg %p154
        %p350 = pneg %p178
        %p351 = pneg %p175
        %p352 = pneg %p199
        %p353 = pneg %p196
        %p354 = pneg %p225
        %p355 = pneg %p222
        %s356 = sand.u32 %s212, 1
        %s357 = scalar_lea.sflag [#allocation4], %s356
        %s358 = sand.u32 %s212, 1
        %s359 = smul.addr %s358, 8
        %s360 = scalar_lea.vmem [#allocation8], %s359
        %p361 = scmp.lt.s32.totalorder %s26, 1
        %s362 = scalar_select %p361, %s26, 1
        %s363 = scalar_lea.vmem %s1, %s362
        %v365 = vld [vmem:[%s317] sm:$0xff]
        %v366 = vld [vmem:[%s363] sm:$0x1]
        %v367 = vsub.f32 %v366, 1.0
        %v368 = vmul.f32 %v367, 1e+09
        %v369 = vld [vmem:[%s6] sm:$0x1]
        %v370 = vld [vmem:[%s7] sm:$0x1]
        %vm371 = vcmask 261120
        %v372 = vsel %vm371, %v365, 0.0
        %373 = vadd.xlane.f32.xlu0 %v372
        %v374 = vpop.xlane.xlu0 %373
        %v375 = vrcp.pop 32.0
        %v376 = vmul.f32 %v374, %v375
        %v377 = vsub.f32 %v365, %v376
        %v378 = vmul.f32 %v377, %v377
        %v379 = vsel %vm371, %v378, 0.0
        %380 = vadd.xlane.f32.xlu0 %v379
        %v381 = vpop.xlane.xlu0 %380
        %v382 = vrcp.pop 31.0
        %v383 = vmul.f32 %v381, %v382
        %v384 = vrsqrt.pop %v383
        %v385 = vmul.f32 %v383, %v384
        %vm386 = vcmp.eq.f32.partialorder %v383, inf
        %v387 = vsel %vm386, %v383, %v385
        %vm388 = vcmp.eq.f32.partialorder %v383, 0.0
        %v389 = vand.u32 %v383, 2147483648
        %v390 = vsel %vm388, %v389, %v387
        %v391 = vadd.f32 %v390, 1e-06
        %v392 = vrcp.pop %v391
        %v393 = vmul.f32 %v377, %v392
        %v395 = vlaneseq
        %v396 = vshrl.u32 %v395, 7
        %v397 = vsub.s32 0, %v396
        %v398 = vrot.slane %v369, %v397
        %v400 = vmul.f32 %v398, %v393
        %v402 = vlaneseq
        %v403 = vshrl.u32 %v402, 7
        %v404 = vsub.s32 0, %v403
        %v405 = vrot.slane %v370, %v404
        %v407 = vadd.f32 %v400, %v405
        %v408 = vpack.c.bf16 %v407, %v407
        %v409 = vld [vmem:[#allocation5] sm:$0xf]
        %v410 = vld [vmem:[#allocation5 + $0x4] sm:$0xf]
        %v411 = vld [vmem:[#allocation5 + $0x8] sm:$0xf]
        %v412 = vld [vmem:[#allocation5 + $0xc] sm:$0xf]
        %v413 = vld [vmem:[%s3] sm:$0x1]
        %v415 = vlaneseq
        %v416 = vshrl.u32 %v415, 7
        %v417 = vsub.s32 0, %v416
        %v418 = vrot.slane %v413, %v417
        %v424 = vunpack.c.l.b16 %v409
        %v425 = vunpack.c.l.b16 %v410
        %v426 = vunpack.c.l.b16 %v411
        %v427 = vunpack.c.l.b16 %v412
        %v428 = vpack.c.b16 %v425, %v424
        %v429 = vpack.c.b16 %v427, %v426
        %v433 = vsel %vm371, %v408, 0
        %435 = vmatprep.subr.bf16.mxu0 0
        %436 = vmatpush1.bf16.msra.mxu0 %v428
        %437 = vmatprep.subr.bf16.mxu0 0
        %438 = vmatpush1.bf16.msra.mxu0 %v429
        %439 = vmatprep.subr.bf16.mxu0 0
        %440 = vmatpush1.bf16.msra.mxu0 0
        %441 = vmatprep.subr.bf16.mxu0 0
        %442 = vmatpush1.bf16.msra.mxu0 0
        %443 = vmatprep.subr.bf16.mxu0 0
        %444 = vmatpush1.bf16.msra.mxu0 0
        %445 = vmatprep.subr.bf16.mxu0 0
        %446 = vmatpush1.bf16.msra.mxu0 0
        %447 = vmatprep.subr.bf16.mxu0 0
        %448 = vmatpush1.bf16.msra.mxu0 0
        %449 = vmatprep.subr.bf16.mxu0 0
        %450 = vmatpush1.bf16.msra.mxu0 0
        %451 = vmatprep.subr.bf16.mxu0 0
        %452 = vmatpush1.bf16.msra.mxu0 0
        %453 = vmatprep.subr.bf16.mxu0 0
        %454 = vmatpush1.bf16.msra.mxu0 0
        %455 = vmatprep.subr.bf16.mxu0 0
        %456 = vmatpush1.bf16.msra.mxu0 0
        %457 = vmatprep.subr.bf16.mxu0 0
        %458 = vmatpush1.bf16.msra.mxu0 0
        %459 = vmatprep.subr.bf16.mxu0 0
        %460 = vmatpush1.bf16.msra.mxu0 0
        %461 = vmatprep.subr.bf16.mxu0 0
        %462 = vmatpush1.bf16.msra.mxu0 0
        %463 = vmatprep.subr.bf16.mxu0 0
        %464 = vmatpush1.bf16.msra.mxu0 0
        %465 = vmatprep.subr.bf16.mxu0 0
        %466 = vmatpush1.bf16.msra.mxu0 0
        %467 = vmatprep.mubr.bf16.mxu0 0
        %468 = vmatmul.mubr.bf16.gmra.mrb[0].mxu0 %v433
        %v469 = vpop.f32.mrb[0].mxu0
        %v470 = vadd.f32 %v418, %v469
        %v471 = vpop.f32.mrb[0].mxu0
        %v472 = vpop.f32.mrb[0].mxu0
        %v473 = vpop.f32.mrb[0].mxu0
        %474 = vdwg.mxu0
        %476 = vrot.lane.b32.xlu0 %v470, 120
        %v477 = vpop.permute.xlu0 %476
        %479 = vrot.lane.b32.xlu0 %v470, 112
        %v480 = vpop.permute.xlu0 %479
        %482 = vrot.lane.b32.xlu0 %v470, 104
        %v483 = vpop.permute.xlu0 %482
        %v485 = vcombine.low %v470, %v480
        %v486 = vcombine.high %v470, %v480
        %v488 = vunpack.c.l.s4 1983009808
        %v489 = vunpack.c.0.s8 %v488
        %v490 = vlaneseq
        %v491 = vshrl.u32 %v490, 7
        %v492 = vsub.s32 %v489, %v491
        %v493 = vrot.slane %v485, %v492
        %v495 = vunpack.c.l.s4 1983009808
        %v496 = vunpack.c.0.s8 %v495
        %v497 = vlaneseq
        %v498 = vshrl.u32 %v497, 7
        %v499 = vsub.s32 %v496, %v498
        %v500 = vrot.slane %v486, %v499
        %v501 = vcombine.low %v477, %v483
        %v502 = vcombine.high %v477, %v483
        %v504 = vunpack.c.l.s4 1983009808
        %v505 = vunpack.c.0.s8 %v504
        %v506 = vlaneseq
        %v507 = vshrl.u32 %v506, 7
        %v508 = vsub.s32 %v505, %v507
        %v509 = vrot.slane %v501, %v508
        %v511 = vunpack.c.l.s4 1983009808
        %v512 = vunpack.c.0.s8 %v511
        %v513 = vlaneseq
        %v514 = vshrl.u32 %v513, 7
        %v515 = vsub.s32 %v512, %v514
        %v516 = vrot.slane %v502, %v515
        %v517 = vcombine.low %v493, %v509
        %v518 = vcombine.high %v493, %v509
        %v520 = vunpack.c.l.s4 1934713408
        %v521 = vunpack.c.0.s8 %v520
        %v522 = vlaneseq
        %v523 = vshrl.u32 %v522, 7
        %v524 = vsub.s32 %v521, %v523
        %v525 = vrot.slane %v517, %v524
        %v527 = vunpack.c.l.s4 1934713408
        %v528 = vunpack.c.0.s8 %v527
        %v529 = vlaneseq
        %v530 = vshrl.u32 %v529, 7
        %v531 = vsub.s32 %v528, %v530
        %v532 = vrot.slane %v518, %v531
        %v533 = vcombine.low %v500, %v516
        %v534 = vcombine.high %v500, %v516
        %v536 = vunpack.c.l.s4 1934713408
        %v537 = vunpack.c.0.s8 %v536
        %v538 = vlaneseq
        %v539 = vshrl.u32 %v538, 7
        %v540 = vsub.s32 %v537, %v539
        %v541 = vrot.slane %v533, %v540
        %v543 = vunpack.c.l.s4 1934713408
        %v544 = vunpack.c.0.s8 %v543
        %v545 = vlaneseq
        %v546 = vshrl.u32 %v545, 7
        %v547 = vsub.s32 %v544, %v546
        %v548 = vrot.slane %v534, %v547
        %v549 = vcombine.high %v525, 0.0
        %v550 = vcombine.high %v532, 0.0
        %v551 = vcombine.high %v541, 0.0
        %v552 = vcombine.high %v548, 0.0
        %v553 = vcombine.low %v525, %v532
        %v555 = vunpack.c.l.s4 1983009808
        %v556 = vunpack.c.0.s8 %v555
        %v557 = vlaneseq
        %v558 = vshrl.u32 %v557, 7
        %v559 = vsub.s32 %v556, %v558
        %v560 = vrot.slane %v553, %v559
        %v561 = vcombine.low %v549, %v550
        %v563 = vunpack.c.l.s4 1983009808
        %v564 = vunpack.c.0.s8 %v563
        %v565 = vlaneseq
        %v566 = vshrl.u32 %v565, 7
        %v567 = vsub.s32 %v564, %v566
        %v568 = vrot.slane %v561, %v567
        %v569 = vcombine.low %v541, %v548
        %v571 = vunpack.c.l.s4 1983009808
        %v572 = vunpack.c.0.s8 %v571
        %v573 = vlaneseq
        %v574 = vshrl.u32 %v573, 7
        %v575 = vsub.s32 %v572, %v574
        %v576 = vrot.slane %v569, %v575
        %v577 = vcombine.low %v551, %v552
        %v579 = vunpack.c.l.s4 1983009808
        %v580 = vunpack.c.0.s8 %v579
        %v581 = vlaneseq
        %v582 = vshrl.u32 %v581, 7
        %v583 = vsub.s32 %v580, %v582
        %v584 = vrot.slane %v577, %v583
        %v585 = vcombine.low %v560, %v568
        %v586 = vcombine.high %v560, %v568
        %v588 = vunpack.c.l.s4 1934713408
        %v589 = vunpack.c.0.s8 %v588
        %v590 = vlaneseq
        %v591 = vshrl.u32 %v590, 7
        %v592 = vsub.s32 %v589, %v591
        %v593 = vrot.slane %v585, %v592
        %v595 = vunpack.c.l.s4 1934713408
        %v596 = vunpack.c.0.s8 %v595
        %v597 = vlaneseq
        %v598 = vshrl.u32 %v597, 7
        %v599 = vsub.s32 %v596, %v598
        %v600 = vrot.slane %v586, %v599
        %v601 = vcombine.low %v576, %v584
        %v602 = vcombine.high %v576, %v584
        %v604 = vunpack.c.l.s4 1934713408
        %v605 = vunpack.c.0.s8 %v604
        %v606 = vlaneseq
        %v607 = vshrl.u32 %v606, 7
        %v608 = vsub.s32 %v605, %v607
        %v609 = vrot.slane %v601, %v608
        %v611 = vunpack.c.l.s4 1934713408
        %v612 = vunpack.c.0.s8 %v611
        %v613 = vlaneseq
        %v614 = vshrl.u32 %v613, 7
        %v615 = vsub.s32 %v612, %v614
        %v616 = vrot.slane %v602, %v615
        %v617 = vcombine.low %v593, %v609
        %v618 = vcombine.high %v593, %v609
        %v619 = vcombine.low %v600, %v616
        %v620 = vcombine.high %v600, %v616
        %v621 = vpack.c.bf16 %v617, %v617
        %v622 = vpack.c.bf16 %v618, %v618
        %v623 = vpack.c.bf16 %v619, %v619
        %v624 = vpack.c.bf16 %v620, %v620
        %625 = vrot.lane.b32.xlu0 %v470, 96
        %v626 = vpop.permute.xlu0 %625
        %627 = vrot.lane.b32.xlu0 %v477, 96
        %v628 = vpop.permute.xlu0 %627
        %629 = vrot.lane.b32.xlu0 %v480, 96
        %v630 = vpop.permute.xlu0 %629
        %631 = vrot.lane.b32.xlu0 %v483, 96
        %v632 = vpop.permute.xlu0 %631
        %v637 = vcombine.low %v626, %v630
        %v638 = vcombine.high %v626, %v630
        %v640 = vunpack.c.l.s4 1983009808
        %v641 = vunpack.c.0.s8 %v640
        %v642 = vlaneseq
        %v643 = vshrl.u32 %v642, 7
        %v644 = vsub.s32 %v641, %v643
        %v645 = vrot.slane %v637, %v644
        %v647 = vunpack.c.l.s4 1983009808
        %v648 = vunpack.c.0.s8 %v647
        %v649 = vlaneseq
        %v650 = vshrl.u32 %v649, 7
        %v651 = vsub.s32 %v648, %v650
        %v652 = vrot.slane %v638, %v651
        %v653 = vcombine.low %v628, %v632
        %v654 = vcombine.high %v628, %v632
        %v656 = vunpack.c.l.s4 1983009808
        %v657 = vunpack.c.0.s8 %v656
        %v658 = vlaneseq
        %v659 = vshrl.u32 %v658, 7
        %v660 = vsub.s32 %v657, %v659
        %v661 = vrot.slane %v653, %v660
        %v663 = vunpack.c.l.s4 1983009808
        %v664 = vunpack.c.0.s8 %v663
        %v665 = vlaneseq
        %v666 = vshrl.u32 %v665, 7
        %v667 = vsub.s32 %v664, %v666
        %v668 = vrot.slane %v654, %v667
        %v669 = vcombine.low %v645, %v661
        %v670 = vcombine.high %v645, %v661
        %v672 = vunpack.c.l.s4 1934713408
        %v673 = vunpack.c.0.s8 %v672
        %v674 = vlaneseq
        %v675 = vshrl.u32 %v674, 7
        %v676 = vsub.s32 %v673, %v675
        %v677 = vrot.slane %v669, %v676
        %v679 = vunpack.c.l.s4 1934713408
        %v680 = vunpack.c.0.s8 %v679
        %v681 = vlaneseq
        %v682 = vshrl.u32 %v681, 7
        %v683 = vsub.s32 %v680, %v682
        %v684 = vrot.slane %v670, %v683
        %v685 = vcombine.low %v652, %v668
        %v686 = vcombine.high %v652, %v668
        %v688 = vunpack.c.l.s4 1934713408
        %v689 = vunpack.c.0.s8 %v688
        %v690 = vlaneseq
        %v691 = vshrl.u32 %v690, 7
        %v692 = vsub.s32 %v689, %v691
        %v693 = vrot.slane %v685, %v692
        %v695 = vunpack.c.l.s4 1934713408
        %v696 = vunpack.c.0.s8 %v695
        %v697 = vlaneseq
        %v698 = vshrl.u32 %v697, 7
        %v699 = vsub.s32 %v696, %v698
        %v700 = vrot.slane %v686, %v699
        %v701 = vcombine.high %v677, 0.0
        %v702 = vcombine.high %v684, 0.0
        %v703 = vcombine.high %v693, 0.0
        %v704 = vcombine.high %v700, 0.0
        %v705 = vcombine.low %v677, %v684
        %v707 = vunpack.c.l.s4 1983009808
        %v708 = vunpack.c.0.s8 %v707
        %v709 = vlaneseq
        %v710 = vshrl.u32 %v709, 7
        %v711 = vsub.s32 %v708, %v710
        %v712 = vrot.slane %v705, %v711
        %v713 = vcombine.low %v701, %v702
        %v715 = vunpack.c.l.s4 1983009808
        %v716 = vunpack.c.0.s8 %v715
        %v717 = vlaneseq
        %v718 = vshrl.u32 %v717, 7
        %v719 = vsub.s32 %v716, %v718
        %v720 = vrot.slane %v713, %v719
        %v721 = vcombine.low %v693, %v700
        %v723 = vunpack.c.l.s4 1983009808
        %v724 = vunpack.c.0.s8 %v723
        %v725 = vlaneseq
        %v726 = vshrl.u32 %v725, 7
        %v727 = vsub.s32 %v724, %v726
        %v728 = vrot.slane %v721, %v727
        %v729 = vcombine.low %v703, %v704
        %v731 = vunpack.c.l.s4 1983009808
        %v732 = vunpack.c.0.s8 %v731
        %v733 = vlaneseq
        %v734 = vshrl.u32 %v733, 7
        %v735 = vsub.s32 %v732, %v734
        %v736 = vrot.slane %v729, %v735
        %v737 = vcombine.low %v712, %v720
        %v738 = vcombine.high %v712, %v720
        %v740 = vunpack.c.l.s4 1934713408
        %v741 = vunpack.c.0.s8 %v740
        %v742 = vlaneseq
        %v743 = vshrl.u32 %v742, 7
        %v744 = vsub.s32 %v741, %v743
        %v745 = vrot.slane %v737, %v744
        %v747 = vunpack.c.l.s4 1934713408
        %v748 = vunpack.c.0.s8 %v747
        %v749 = vlaneseq
        %v750 = vshrl.u32 %v749, 7
        %v751 = vsub.s32 %v748, %v750
        %v752 = vrot.slane %v738, %v751
        %v753 = vcombine.low %v728, %v736
        %v754 = vcombine.high %v728, %v736
        %v756 = vunpack.c.l.s4 1934713408
        %v757 = vunpack.c.0.s8 %v756
        %v758 = vlaneseq
        %v759 = vshrl.u32 %v758, 7
        %v760 = vsub.s32 %v757, %v759
        %v761 = vrot.slane %v753, %v760
        %v763 = vunpack.c.l.s4 1934713408
        %v764 = vunpack.c.0.s8 %v763
        %v765 = vlaneseq
        %v766 = vshrl.u32 %v765, 7
        %v767 = vsub.s32 %v764, %v766
        %v768 = vrot.slane %v754, %v767
        %v769 = vcombine.low %v745, %v761
        %v770 = vcombine.high %v745, %v761
        %v771 = vcombine.low %v752, %v768
        %v772 = vcombine.high %v752, %v768
        %v773 = vpack.c.bf16 %v769, %v769
        %v774 = vpack.c.bf16 %v770, %v770
        %v775 = vpack.c.bf16 %v771, %v771
        %v776 = vpack.c.bf16 %v772, %v772
        %777 = vrot.lane.b32.xlu0 %v470, 64
        %v778 = vpop.permute.xlu0 %777
        %779 = vrot.lane.b32.xlu0 %v477, 64
        %v780 = vpop.permute.xlu0 %779
        %781 = vrot.lane.b32.xlu0 %v480, 64
        %v782 = vpop.permute.xlu0 %781
        %783 = vrot.lane.b32.xlu0 %v483, 64
        %v784 = vpop.permute.xlu0 %783
        %v789 = vcombine.low %v778, %v782
        %v790 = vcombine.high %v778, %v782
        %v792 = vunpack.c.l.s4 1983009808
        %v793 = vunpack.c.0.s8 %v792
        %v794 = vlaneseq
        %v795 = vshrl.u32 %v794, 7
        %v796 = vsub.s32 %v793, %v795
        %v797 = vrot.slane %v789, %v796
        %v799 = vunpack.c.l.s4 1983009808
        %v800 = vunpack.c.0.s8 %v799
        %v801 = vlaneseq
        %v802 = vshrl.u32 %v801, 7
        %v803 = vsub.s32 %v800, %v802
        %v804 = vrot.slane %v790, %v803
        %v805 = vcombine.low %v780, %v784
        %v806 = vcombine.high %v780, %v784
        %v808 = vunpack.c.l.s4 1983009808
        %v809 = vunpack.c.0.s8 %v808
        %v810 = vlaneseq
        %v811 = vshrl.u32 %v810, 7
        %v812 = vsub.s32 %v809, %v811
        %v813 = vrot.slane %v805, %v812
        %v815 = vunpack.c.l.s4 1983009808
        %v816 = vunpack.c.0.s8 %v815
        %v817 = vlaneseq
        %v818 = vshrl.u32 %v817, 7
        %v819 = vsub.s32 %v816, %v818
        %v820 = vrot.slane %v806, %v819
        %v821 = vcombine.low %v797, %v813
        %v822 = vcombine.high %v797, %v813
        %v824 = vunpack.c.l.s4 1934713408
        %v825 = vunpack.c.0.s8 %v824
        %v826 = vlaneseq
        %v827 = vshrl.u32 %v826, 7
        %v828 = vsub.s32 %v825, %v827
        %v829 = vrot.slane %v821, %v828
        %v831 = vunpack.c.l.s4 1934713408
        %v832 = vunpack.c.0.s8 %v831
        %v833 = vlaneseq
        %v834 = vshrl.u32 %v833, 7
        %v835 = vsub.s32 %v832, %v834
        %v836 = vrot.slane %v822, %v835
        %v837 = vcombine.low %v804, %v820
        %v838 = vcombine.high %v804, %v820
        %v840 = vunpack.c.l.s4 1934713408
        %v841 = vunpack.c.0.s8 %v840
        %v842 = vlaneseq
        %v843 = vshrl.u32 %v842, 7
        %v844 = vsub.s32 %v841, %v843
        %v845 = vrot.slane %v837, %v844
        %v847 = vunpack.c.l.s4 1934713408
        %v848 = vunpack.c.0.s8 %v847
        %v849 = vlaneseq
        %v850 = vshrl.u32 %v849, 7
        %v851 = vsub.s32 %v848, %v850
        %v852 = vrot.slane %v838, %v851
        %v853 = vcombine.high %v829, 0.0
        %v854 = vcombine.high %v836, 0.0
        %v855 = vcombine.high %v845, 0.0
        %v856 = vcombine.high %v852, 0.0
        %v857 = vcombine.low %v829, %v836
        %v859 = vunpack.c.l.s4 1983009808
        %v860 = vunpack.c.0.s8 %v859
        %v861 = vlaneseq
        %v862 = vshrl.u32 %v861, 7
        %v863 = vsub.s32 %v860, %v862
        %v864 = vrot.slane %v857, %v863
        %v865 = vcombine.low %v853, %v854
        %v867 = vunpack.c.l.s4 1983009808
        %v868 = vunpack.c.0.s8 %v867
        %v869 = vlaneseq
        %v870 = vshrl.u32 %v869, 7
        %v871 = vsub.s32 %v868, %v870
        %v872 = vrot.slane %v865, %v871
        %v873 = vcombine.low %v845, %v852
        %v875 = vunpack.c.l.s4 1983009808
        %v876 = vunpack.c.0.s8 %v875
        %v877 = vlaneseq
        %v878 = vshrl.u32 %v877, 7
        %v879 = vsub.s32 %v876, %v878
        %v880 = vrot.slane %v873, %v879
        %v881 = vcombine.low %v855, %v856
        %v883 = vunpack.c.l.s4 1983009808
        %v884 = vunpack.c.0.s8 %v883
        %v885 = vlaneseq
        %v886 = vshrl.u32 %v885, 7
        %v887 = vsub.s32 %v884, %v886
        %v888 = vrot.slane %v881, %v887
        %v889 = vcombine.low %v864, %v872
        %v890 = vcombine.high %v864, %v872
        %v892 = vunpack.c.l.s4 1934713408
        %v893 = vunpack.c.0.s8 %v892
        %v894 = vlaneseq
        %v895 = vshrl.u32 %v894, 7
        %v896 = vsub.s32 %v893, %v895
        %v897 = vrot.slane %v889, %v896
        %v899 = vunpack.c.l.s4 1934713408
        %v900 = vunpack.c.0.s8 %v899
        %v901 = vlaneseq
        %v902 = vshrl.u32 %v901, 7
        %v903 = vsub.s32 %v900, %v902
        %v904 = vrot.slane %v890, %v903
        %v905 = vcombine.low %v880, %v888
        %v906 = vcombine.high %v880, %v888
        %v908 = vunpack.c.l.s4 1934713408
        %v909 = vunpack.c.0.s8 %v908
        %v910 = vlaneseq
        %v911 = vshrl.u32 %v910, 7
        %v912 = vsub.s32 %v909, %v911
        %v913 = vrot.slane %v905, %v912
        %v915 = vunpack.c.l.s4 1934713408
        %v916 = vunpack.c.0.s8 %v915
        %v917 = vlaneseq
        %v918 = vshrl.u32 %v917, 7
        %v919 = vsub.s32 %v916, %v918
        %v920 = vrot.slane %v906, %v919
        %v921 = vcombine.low %v897, %v913
        %v922 = vcombine.high %v897, %v913
        %v923 = vcombine.low %v904, %v920
        %v924 = vcombine.high %v904, %v920
        %v925 = vpack.c.bf16 %v921, %v921
        %v926 = vpack.c.bf16 %v922, %v922
        %v927 = vpack.c.bf16 %v923, %v923
        %v928 = vpack.c.bf16 %v924, %v924
        %v930 = vlaneseq
        %v931 = vshrl.u32 %v930, 7
        %v932 = vsub.s32 0, %v931
        %v933 = vrot.slane %v368, %v932
        %vm935 = vcmask 64512
        %v937 = vsel %vm935, %v621, 0
        %v940 = vsel %vm935, %v773, 0
        %942 = vmatprep.subr.bf16.mxu0 0
        %943 = vmatpush1.bf16.xpose.msra.mxu0 %v940
        %944 = vmatprep.subr.bf16.mxu0 0
        %945 = vmatpush1.bf16.xpose.msra.mxu0 0
        %946 = vmatprep.subr.bf16.mxu0 0
        %947 = vmatpush1.bf16.xpose.msra.mxu0 0
        %948 = vmatprep.subr.bf16.mxu0 0
        %949 = vmatpush1.bf16.xpose.msra.mxu0 0
        %950 = vmatprep.subr.bf16.mxu0 0
        %951 = vmatpush1.bf16.xpose.msra.mxu0 0
        %952 = vmatprep.subr.bf16.mxu0 0
        %953 = vmatpush1.bf16.xpose.msra.mxu0 0
        %954 = vmatprep.subr.bf16.mxu0 0
        %955 = vmatpush1.bf16.xpose.msra.mxu0 0
        %956 = vmatprep.subr.bf16.mxu0 0
        %957 = vmatpush1.bf16.xpose.msra.mxu0 0
        %958 = vmatprep.subr.bf16.mxu0 0
        %959 = vmatpush1.bf16.xpose.msra.mxu0 0
        %960 = vmatprep.subr.bf16.mxu0 0
        %961 = vmatpush1.bf16.xpose.msra.mxu0 0
        %962 = vmatprep.subr.bf16.mxu0 0
        %963 = vmatpush1.bf16.xpose.msra.mxu0 0
        %964 = vmatprep.subr.bf16.mxu0 0
        %965 = vmatpush1.bf16.xpose.msra.mxu0 0
        %966 = vmatprep.subr.bf16.mxu0 0
        %967 = vmatpush1.bf16.xpose.msra.mxu0 0
        %968 = vmatprep.subr.bf16.mxu0 0
        %969 = vmatpush1.bf16.xpose.msra.mxu0 0
        %970 = vmatprep.subr.bf16.mxu0 0
        %971 = vmatpush1.bf16.xpose.msra.mxu0 0
        %972 = vmatprep.subr.bf16.mxu0 0
        %973 = vmatpush1.bf16.xpose.msra.mxu0 0
        %974 = vmatprep.mubr.bf16.mxu0 0
        %975 = vmatmul.mubr.bf16.gmra.mrb[0].mxu0 %v937
        %v976 = vpop.f32.mrb[0].mxu0
        %v977 = vadd.f32 %v933, %v976
        %v978 = vpop.f32.mrb[0].mxu0
        %v979 = vpop.f32.mrb[0].mxu0
        %v980 = vpop.f32.mrb[0].mxu0
        %981 = vdwg.mxu0
        %v983 = vsel %vm935, %v622, 0
        %v986 = vsel %vm935, %v774, 0
        %988 = vmatprep.subr.bf16.mxu0 0
        %989 = vmatpush1.bf16.xpose.msra.mxu0 %v986
        %990 = vmatprep.subr.bf16.mxu0 0
        %991 = vmatpush1.bf16.xpose.msra.mxu0 0
        %992 = vmatprep.subr.bf16.mxu0 0
        %993 = vmatpush1.bf16.xpose.msra.mxu0 0
        %994 = vmatprep.subr.bf16.mxu0 0
        %995 = vmatpush1.bf16.xpose.msra.mxu0 0
        %996 = vmatprep.subr.bf16.mxu0 0
        %997 = vmatpush1.bf16.xpose.msra.mxu0 0
        %998 = vmatprep.subr.bf16.mxu0 0
        %999 = vmatpush1.bf16.xpose.msra.mxu0 0
        %1000 = vmatprep.subr.bf16.mxu0 0
        %1001 = vmatpush1.bf16.xpose.msra.mxu0 0
        %1002 = vmatprep.subr.bf16.mxu0 0
        %1003 = vmatpush1.bf16.xpose.msra.mxu0 0
        %1004 = vmatprep.subr.bf16.mxu0 0
        %1005 = vmatpush1.bf16.xpose.msra.mxu0 0
        %1006 = vmatprep.subr.bf16.mxu0 0
        %1007 = vmatpush1.bf16.xpose.msra.mxu0 0
        %1008 = vmatprep.subr.bf16.mxu0 0
        %1009 = vmatpush1.bf16.xpose.msra.mxu0 0
        %1010 = vmatprep.subr.bf16.mxu0 0
        %1011 = vmatpush1.bf16.xpose.msra.mxu0 0
        %1012 = vmatprep.subr.bf16.mxu0 0
        %1013 = vmatpush1.bf16.xpose.msra.mxu0 0
        %1014 = vmatprep.subr.bf16.mxu0 0
        %1015 = vmatpush1.bf16.xpose.msra.mxu0 0
        %1016 = vmatprep.subr.bf16.mxu0 0
        %1017 = vmatpush1.bf16.xpose.msra.mxu0 0
        %1018 = vmatprep.subr.bf16.mxu0 0
        %1019 = vmatpush1.bf16.xpose.msra.mxu0 0
        %1020 = vmatprep.mubr.bf16.mxu0 0
        %1021 = vmatmul.mubr.bf16.gmra.mrb[0].mxu0 %v983
        %v1022 = vpop.f32.mrb[0].mxu0
        %v1023 = vadd.f32 %v933, %v1022
        %v1024 = vpop.f32.mrb[0].mxu0
        %v1025 = vpop.f32.mrb[0].mxu0
        %v1026 = vpop.f32.mrb[0].mxu0
        %1027 = vdwg.mxu0
        %v1029 = vsel %vm935, %v623, 0
        %v1032 = vsel %vm935, %v775, 0
        %1034 = vmatprep.subr.bf16.mxu0 0
        %1035 = vmatpush1.bf16.xpose.msra.mxu0 %v1032
        %1036 = vmatprep.subr.bf16.mxu0 0
        %1037 = vmatpush1.bf16.xpose.msra.mxu0 0
        %1038 = vmatprep.subr.bf16.mxu0 0
        %1039 = vmatpush1.bf16.xpose.msra.mxu0 0
        %1040 = vmatprep.subr.bf16.mxu0 0
        %1041 = vmatpush1.bf16.xpose.msra.mxu0 0
        %1042 = vmatprep.subr.bf16.mxu0 0
        %1043 = vmatpush1.bf16.xpose.msra.mxu0 0
        %1044 = vmatprep.subr.bf16.mxu0 0
        %1045 = vmatpush1.bf16.xpose.msra.mxu0 0
        %1046 = vmatprep.subr.bf16.mxu0 0
        %1047 = vmatpush1.bf16.xpose.msra.mxu0 0
        %1048 = vmatprep.subr.bf16.mxu0 0
        %1049 = vmatpush1.bf16.xpose.msra.mxu0 0
        %1050 = vmatprep.subr.bf16.mxu0 0
        %1051 = vmatpush1.bf16.xpose.msra.mxu0 0
        %1052 = vmatprep.subr.bf16.mxu0 0
        %1053 = vmatpush1.bf16.xpose.msra.mxu0 0
        %1054 = vmatprep.subr.bf16.mxu0 0
        %1055 = vmatpush1.bf16.xpose.msra.mxu0 0
        %1056 = vmatprep.subr.bf16.mxu0 0
        %1057 = vmatpush1.bf16.xpose.msra.mxu0 0
        %1058 = vmatprep.subr.bf16.mxu0 0
        %1059 = vmatpush1.bf16.xpose.msra.mxu0 0
        %1060 = vmatprep.subr.bf16.mxu0 0
        %1061 = vmatpush1.bf16.xpose.msra.mxu0 0
        %1062 = vmatprep.subr.bf16.mxu0 0
        %1063 = vmatpush1.bf16.xpose.msra.mxu0 0
        %1064 = vmatprep.subr.bf16.mxu0 0
        %1065 = vmatpush1.bf16.xpose.msra.mxu0 0
        %1066 = vmatprep.mubr.bf16.mxu0 0
        %1067 = vmatmul.mubr.bf16.gmra.mrb[0].mxu0 %v1029
        %v1068 = vpop.f32.mrb[0].mxu0
        %v1069 = vadd.f32 %v933, %v1068
        %v1070 = vpop.f32.mrb[0].mxu0
        %v1071 = vpop.f32.mrb[0].mxu0
        %v1072 = vpop.f32.mrb[0].mxu0
        %1073 = vdwg.mxu0
        %v1075 = vsel %vm935, %v624, 0
        %v1078 = vsel %vm935, %v776, 0
        %1080 = vmatprep.subr.bf16.mxu0 0
        %1081 = vmatpush1.bf16.xpose.msra.mxu0 %v1078
        %1082 = vmatprep.subr.bf16.mxu0 0
        %1083 = vmatpush1.bf16.xpose.msra.mxu0 0
        %1084 = vmatprep.subr.bf16.mxu0 0
        %1085 = vmatpush1.bf16.xpose.msra.mxu0 0
        %1086 = vmatprep.subr.bf16.mxu0 0
        %1087 = vmatpush1.bf16.xpose.msra.mxu0 0
        %1088 = vmatprep.subr.bf16.mxu0 0
        %1089 = vmatpush1.bf16.xpose.msra.mxu0 0
        %1090 = vmatprep.subr.bf16.mxu0 0
        %1091 = vmatpush1.bf16.xpose.msra.mxu0 0
        %1092 = vmatprep.subr.bf16.mxu0 0
        %1093 = vmatpush1.bf16.xpose.msra.mxu0 0
        %1094 = vmatprep.subr.bf16.mxu0 0
        %1095 = vmatpush1.bf16.xpose.msra.mxu0 0
        %1096 = vmatprep.subr.bf16.mxu0 0
        %1097 = vmatpush1.bf16.xpose.msra.mxu0 0
        %1098 = vmatprep.subr.bf16.mxu0 0
        %1099 = vmatpush1.bf16.xpose.msra.mxu0 0
        %1100 = vmatprep.subr.bf16.mxu0 0
        %1101 = vmatpush1.bf16.xpose.msra.mxu0 0
        %1102 = vmatprep.subr.bf16.mxu0 0
        %1103 = vmatpush1.bf16.xpose.msra.mxu0 0
        %1104 = vmatprep.subr.bf16.mxu0 0
        %1105 = vmatpush1.bf16.xpose.msra.mxu0 0
        %1106 = vmatprep.subr.bf16.mxu0 0
        %1107 = vmatpush1.bf16.xpose.msra.mxu0 0
        %1108 = vmatprep.subr.bf16.mxu0 0
        %1109 = vmatpush1.bf16.xpose.msra.mxu0 0
        %1110 = vmatprep.subr.bf16.mxu0 0
        %1111 = vmatpush1.bf16.xpose.msra.mxu0 0
        %1112 = vmatprep.mubr.bf16.mxu0 0
        %1113 = vmatmul.mubr.bf16.gmra.mrb[0].mxu0 %v1075
        %v1114 = vpop.f32.mrb[0].mxu0
        %v1115 = vadd.f32 %v933, %v1114
        %v1116 = vpop.f32.mrb[0].mxu0
        %v1117 = vpop.f32.mrb[0].mxu0
        %v1118 = vpop.f32.mrb[0].mxu0
        %1119 = vdwg.mxu0
        %v1120 = vsel %vm935, %v977, -inf
        %1121 = vmax.xlane.f32.xlu0 %v1120
        %v1122 = vpop.xlane.xlu0 %1121
        %v1123 = vsel %vm935, %v1023, -inf
        %1124 = vmax.xlane.f32.xlu0 %v1123
        %v1125 = vpop.xlane.xlu0 %1124
        %v1126 = vsel %vm935, %v1069, -inf
        %1127 = vmax.xlane.f32.xlu0 %v1126
        %v1128 = vpop.xlane.xlu0 %1127
        %v1129 = vsel %vm935, %v1115, -inf
        %1130 = vmax.xlane.f32.xlu0 %v1129
        %v1131 = vpop.xlane.xlu0 %1130
        %v1132 = vsub.f32 %v977, %v1122
        %v1133 = vsub.f32 %v1023, %v1125
        %v1134 = vsub.f32 %v1069, %v1128
        %v1135 = vsub.f32 %v1115, %v1131
        %v1136 = vmul.f32 %v1132, 1.442695
        %v1137 = vpow.pop %v1136
        %v1138 = vmul.f32 %v1133, 1.442695
        %v1139 = vpow.pop %v1138
        %v1140 = vmul.f32 %v1134, 1.442695
        %v1141 = vpow.pop %v1140
        %v1142 = vmul.f32 %v1135, 1.442695
        %v1143 = vpow.pop %v1142
        %v1144 = vsel %vm935, %v1137, 0.0
        %1145 = vadd.xlane.f32.xlu0 %v1144
        %v1146 = vpop.xlane.xlu0 %1145
        %v1147 = vsel %vm935, %v1139, 0.0
        %1148 = vadd.xlane.f32.xlu0 %v1147
        %v1149 = vpop.xlane.xlu0 %1148
        %v1150 = vsel %vm935, %v1141, 0.0
        %1151 = vadd.xlane.f32.xlu0 %v1150
        %v1152 = vpop.xlane.xlu0 %1151
        %v1153 = vsel %vm935, %v1143, 0.0
        %1154 = vadd.xlane.f32.xlu0 %v1153
        %v1155 = vpop.xlane.xlu0 %1154
        %v1156 = vrcp.pop %v1146
        %v1157 = vrcp.pop %v1149
        %v1158 = vrcp.pop %v1152
        %v1159 = vrcp.pop %v1155
        %v1160 = vmul.f32 %v1137, %v1156
        %v1161 = vmul.f32 %v1139, %v1157
        %v1162 = vmul.f32 %v1141, %v1158
        %v1163 = vmul.f32 %v1143, %v1159
        %v1164 = vpack.c.bf16 %v1160, %v1160
        %v1165 = vpack.c.bf16 %v1161, %v1161
        %v1166 = vpack.c.bf16 %v1162, %v1162
        %v1167 = vpack.c.bf16 %v1163, %v1163
        %v1169 = vsel %vm935, %v1164, 0
        %vm1171 = vcmask 1043456
        %v1173 = vsel %vm1171, %v925, 0
        %1175 = vmatprep.subr.bf16.mxu0 0
        %1176 = vmatpush1.bf16.msra.mxu0 %v1173
        %1177 = vmatprep.subr.bf16.mxu0 0
        %1178 = vmatpush1.bf16.msra.mxu0 0
        %1179 = vmatprep.subr.bf16.mxu0 0
        %1180 = vmatpush1.bf16.msra.mxu0 0
        %1181 = vmatprep.subr.bf16.mxu0 0
        %1182 = vmatpush1.bf16.msra.mxu0 0
        %1183 = vmatprep.subr.bf16.mxu0 0
        %1184 = vmatpush1.bf16.msra.mxu0 0
        %1185 = vmatprep.subr.bf16.mxu0 0
        %1186 = vmatpush1.bf16.msra.mxu0 0
        %1187 = vmatprep.subr.bf16.mxu0 0
        %1188 = vmatpush1.bf16.msra.mxu0 0
        %1189 = vmatprep.subr.bf16.mxu0 0
        %1190 = vmatpush1.bf16.msra.mxu0 0
        %1191 = vmatprep.subr.bf16.mxu0 0
        %1192 = vmatpush1.bf16.msra.mxu0 0
        %1193 = vmatprep.subr.bf16.mxu0 0
        %1194 = vmatpush1.bf16.msra.mxu0 0
        %1195 = vmatprep.subr.bf16.mxu0 0
        %1196 = vmatpush1.bf16.msra.mxu0 0
        %1197 = vmatprep.subr.bf16.mxu0 0
        %1198 = vmatpush1.bf16.msra.mxu0 0
        %1199 = vmatprep.subr.bf16.mxu0 0
        %1200 = vmatpush1.bf16.msra.mxu0 0
        %1201 = vmatprep.subr.bf16.mxu0 0
        %1202 = vmatpush1.bf16.msra.mxu0 0
        %1203 = vmatprep.subr.bf16.mxu0 0
        %1204 = vmatpush1.bf16.msra.mxu0 0
        %1205 = vmatprep.subr.bf16.mxu0 0
        %1206 = vmatpush1.bf16.msra.mxu0 0
        %1207 = vmatprep.mubr.bf16.mxu0 0
        %1208 = vmatmul.mubr.bf16.gmra.mrb[0].mxu0 %v1169
        %v1209 = vpop.f32.mrb[0].mxu0
        %v1210 = vadd.f32 0.0, %v1209
        %v1211 = vpop.f32.mrb[0].mxu0
        %v1212 = vpop.f32.mrb[0].mxu0
        %v1213 = vpop.f32.mrb[0].mxu0
        %1214 = vdwg.mxu0
        %v1216 = vsel %vm935, %v1165, 0
        %v1219 = vsel %vm1171, %v926, 0
        %1221 = vmatprep.subr.bf16.mxu0 0
        %1222 = vmatpush1.bf16.msra.mxu0 %v1219
        %1223 = vmatprep.subr.bf16.mxu0 0
        %1224 = vmatpush1.bf16.msra.mxu0 0
        %1225 = vmatprep.subr.bf16.mxu0 0
        %1226 = vmatpush1.bf16.msra.mxu0 0
        %1227 = vmatprep.subr.bf16.mxu0 0
        %1228 = vmatpush1.bf16.msra.mxu0 0
        %1229 = vmatprep.subr.bf16.mxu0 0
        %1230 = vmatpush1.bf16.msra.mxu0 0
        %1231 = vmatprep.subr.bf16.mxu0 0
        %1232 = vmatpush1.bf16.msra.mxu0 0
        %1233 = vmatprep.subr.bf16.mxu0 0
        %1234 = vmatpush1.bf16.msra.mxu0 0
        %1235 = vmatprep.subr.bf16.mxu0 0
        %1236 = vmatpush1.bf16.msra.mxu0 0
        %1237 = vmatprep.subr.bf16.mxu0 0
        %1238 = vmatpush1.bf16.msra.mxu0 0
        %1239 = vmatprep.subr.bf16.mxu0 0
        %1240 = vmatpush1.bf16.msra.mxu0 0
        %1241 = vmatprep.subr.bf16.mxu0 0
        %1242 = vmatpush1.bf16.msra.mxu0 0
        %1243 = vmatprep.subr.bf16.mxu0 0
        %1244 = vmatpush1.bf16.msra.mxu0 0
        %1245 = vmatprep.subr.bf16.mxu0 0
        %1246 = vmatpush1.bf16.msra.mxu0 0
        %1247 = vmatprep.subr.bf16.mxu0 0
        %1248 = vmatpush1.bf16.msra.mxu0 0
        %1249 = vmatprep.subr.bf16.mxu0 0
        %1250 = vmatpush1.bf16.msra.mxu0 0
        %1251 = vmatprep.subr.bf16.mxu0 0
        %1252 = vmatpush1.bf16.msra.mxu0 0
        %1253 = vmatprep.mubr.bf16.mxu0 0
        %1254 = vmatmul.mubr.bf16.gmra.mrb[0].mxu0 %v1216
        %v1255 = vpop.f32.mrb[0].mxu0
        %v1256 = vadd.f32 0.0, %v1255
        %v1257 = vpop.f32.mrb[0].mxu0
        %v1258 = vpop.f32.mrb[0].mxu0
        %v1259 = vpop.f32.mrb[0].mxu0
        %1260 = vdwg.mxu0
        %v1262 = vsel %vm935, %v1166, 0
        %v1265 = vsel %vm1171, %v927, 0
        %1267 = vmatprep.subr.bf16.mxu0 0
        %1268 = vmatpush1.bf16.msra.mxu0 %v1265
        %1269 = vmatprep.subr.bf16.mxu0 0
        %1270 = vmatpush1.bf16.msra.mxu0 0
        %1271 = vmatprep.subr.bf16.mxu0 0
        %1272 = vmatpush1.bf16.msra.mxu0 0
        %1273 = vmatprep.subr.bf16.mxu0 0
        %1274 = vmatpush1.bf16.msra.mxu0 0
        %1275 = vmatprep.subr.bf16.mxu0 0
        %1276 = vmatpush1.bf16.msra.mxu0 0
        %1277 = vmatprep.subr.bf16.mxu0 0
        %1278 = vmatpush1.bf16.msra.mxu0 0
        %1279 = vmatprep.subr.bf16.mxu0 0
        %1280 = vmatpush1.bf16.msra.mxu0 0
        %1281 = vmatprep.subr.bf16.mxu0 0
        %1282 = vmatpush1.bf16.msra.mxu0 0
        %1283 = vmatprep.subr.bf16.mxu0 0
        %1284 = vmatpush1.bf16.msra.mxu0 0
        %1285 = vmatprep.subr.bf16.mxu0 0
        %1286 = vmatpush1.bf16.msra.mxu0 0
        %1287 = vmatprep.subr.bf16.mxu0 0
        %1288 = vmatpush1.bf16.msra.mxu0 0
        %1289 = vmatprep.subr.bf16.mxu0 0
        %1290 = vmatpush1.bf16.msra.mxu0 0
        %1291 = vmatprep.subr.bf16.mxu0 0
        %1292 = vmatpush1.bf16.msra.mxu0 0
        %1293 = vmatprep.subr.bf16.mxu0 0
        %1294 = vmatpush1.bf16.msra.mxu0 0
        %1295 = vmatprep.subr.bf16.mxu0 0
        %1296 = vmatpush1.bf16.msra.mxu0 0
        %1297 = vmatprep.subr.bf16.mxu0 0
        %1298 = vmatpush1.bf16.msra.mxu0 0
        %1299 = vmatprep.mubr.bf16.mxu0 0
        %1300 = vmatmul.mubr.bf16.gmra.mrb[0].mxu0 %v1262
        %v1301 = vpop.f32.mrb[0].mxu0
        %v1302 = vadd.f32 0.0, %v1301
        %v1303 = vpop.f32.mrb[0].mxu0
        %v1304 = vpop.f32.mrb[0].mxu0
        %v1305 = vpop.f32.mrb[0].mxu0
        %1306 = vdwg.mxu0
        %v1308 = vsel %vm935, %v1167, 0
        %v1311 = vsel %vm1171, %v928, 0
        %1313 = vmatprep.subr.bf16.mxu0 0
        %1314 = vmatpush1.bf16.msra.mxu0 %v1311
        %1315 = vmatprep.subr.bf16.mxu0 0
        %1316 = vmatpush1.bf16.msra.mxu0 0
        %1317 = vmatprep.subr.bf16.mxu0 0
        %1318 = vmatpush1.bf16.msra.mxu0 0
        %1319 = vmatprep.subr.bf16.mxu0 0
        %1320 = vmatpush1.bf16.msra.mxu0 0
        %1321 = vmatprep.subr.bf16.mxu0 0
        %1322 = vmatpush1.bf16.msra.mxu0 0
        %1323 = vmatprep.subr.bf16.mxu0 0
        %1324 = vmatpush1.bf16.msra.mxu0 0
        %1325 = vmatprep.subr.bf16.mxu0 0
        %1326 = vmatpush1.bf16.msra.mxu0 0
        %1327 = vmatprep.subr.bf16.mxu0 0
        %1328 = vmatpush1.bf16.msra.mxu0 0
        %1329 = vmatprep.subr.bf16.mxu0 0
        %1330 = vmatpush1.bf16.msra.mxu0 0
        %1331 = vmatprep.subr.bf16.mxu0 0
        %1332 = vmatpush1.bf16.msra.mxu0 0
        %1333 = vmatprep.subr.bf16.mxu0 0
        %1334 = vmatpush1.bf16.msra.mxu0 0
        %1335 = vmatprep.subr.bf16.mxu0 0
        %1336 = vmatpush1.bf16.msra.mxu0 0
        %1337 = vmatprep.subr.bf16.mxu0 0
        %1338 = vmatpush1.bf16.msra.mxu0 0
        %1339 = vmatprep.subr.bf16.mxu0 0
        %1340 = vmatpush1.bf16.msra.mxu0 0
        %1341 = vmatprep.subr.bf16.mxu0 0
        %1342 = vmatpush1.bf16.msra.mxu0 0
        %1343 = vmatprep.subr.bf16.mxu0 0
        %1344 = vmatpush1.bf16.msra.mxu0 0
        %1345 = vmatprep.mubr.bf16.mxu0 0
        %1346 = vmatmul.mubr.bf16.gmra.mrb[0].mxu0 %v1308
        %v1347 = vpop.f32.mrb[0].mxu0
        %v1348 = vadd.f32 0.0, %v1347
        %v1349 = vpop.f32.mrb[0].mxu0
        %v1350 = vpop.f32.mrb[0].mxu0
        %v1351 = vpop.f32.mrb[0].mxu0
        %1352 = vdwg.mxu0
        %v1353 = vpack.c.bf16 %v1210, %v1210
        %v1355 = vunpack.c.l.s4 1983009808
        %v1356 = vunpack.c.0.s8 %v1355
        %v1357 = vlaneseq
        %v1358 = vshrl.u32 %v1357, 7
        %v1359 = vsub.s32 %v1356, %v1358
        %v1360 = vrot.slane %v1353, %v1359
        %v1361 = vpack.c.bf16 %v1302, %v1302
        %v1363 = vunpack.c.l.s4 1983009808
        %v1364 = vunpack.c.0.s8 %v1363
        %v1365 = vlaneseq
        %v1366 = vshrl.u32 %v1365, 7
        %v1367 = vsub.s32 %v1364, %v1366
        %v1368 = vrot.slane %v1361, %v1367
        %v1369 = vcombine.low %v1360, %v1368
        %v1370 = vcombine.high %v1360, %v1368
        %v1372 = vunpack.c.l.s4 1934713408
        %v1373 = vunpack.c.0.s8 %v1372
        %v1374 = vlaneseq
        %v1375 = vshrl.u32 %v1374, 7
        %v1376 = vsub.s32 %v1373, %v1375
        %v1377 = vrot.slane %v1369, %v1376
        %v1379 = vunpack.c.l.s4 1934713408
        %v1380 = vunpack.c.0.s8 %v1379
        %v1381 = vlaneseq
        %v1382 = vshrl.u32 %v1381, 7
        %v1383 = vsub.s32 %v1380, %v1382
        %v1384 = vrot.slane %v1370, %v1383
        %v1385 = vcombine.high %v1377, 0
        %v1386 = vcombine.high %v1384, 0
        %v1387 = vpack.c.bf16 %v1256, %v1256
        %v1389 = vunpack.c.l.s4 1983009808
        %v1390 = vunpack.c.0.s8 %v1389
        %v1391 = vlaneseq
        %v1392 = vshrl.u32 %v1391, 7
        %v1393 = vsub.s32 %v1390, %v1392
        %v1394 = vrot.slane %v1387, %v1393
        %v1395 = vpack.c.bf16 %v1348, %v1348
        %v1397 = vunpack.c.l.s4 1983009808
        %v1398 = vunpack.c.0.s8 %v1397
        %v1399 = vlaneseq
        %v1400 = vshrl.u32 %v1399, 7
        %v1401 = vsub.s32 %v1398, %v1400
        %v1402 = vrot.slane %v1395, %v1401
        %v1403 = vcombine.low %v1394, %v1402
        %v1404 = vcombine.high %v1394, %v1402
        %v1406 = vunpack.c.l.s4 1934713408
        %v1407 = vunpack.c.0.s8 %v1406
        %v1408 = vlaneseq
        %v1409 = vshrl.u32 %v1408, 7
        %v1410 = vsub.s32 %v1407, %v1409
        %v1411 = vrot.slane %v1403, %v1410
        %v1413 = vunpack.c.l.s4 1934713408
        %v1414 = vunpack.c.0.s8 %v1413
        %v1415 = vlaneseq
        %v1416 = vshrl.u32 %v1415, 7
        %v1417 = vsub.s32 %v1414, %v1416
        %v1418 = vrot.slane %v1404, %v1417
        %v1419 = vcombine.high %v1411, 0
        %v1420 = vcombine.high %v1418, 0
        %v1423 = vpack.i.b16 %v1411, %v1377
        %v1425 = vshrl.u32 %v1377, 16
        %v1426 = vshrl.u32 %v1411, 16
        %v1427 = vpack.i.b16 %v1426, %v1425
        %v1431 = vpack.i.b16 %v1419, %v1385
        %v1433 = vshrl.u32 %v1385, 16
        %v1434 = vshrl.u32 %v1419, 16
        %v1435 = vpack.i.b16 %v1434, %v1433
        %v1439 = vpack.i.b16 %v1418, %v1384
        %v1441 = vshrl.u32 %v1384, 16
        %v1442 = vshrl.u32 %v1418, 16
        %v1443 = vpack.i.b16 %v1442, %v1441
        %v1447 = vpack.i.b16 %v1420, %v1386
        %v1449 = vshrl.u32 %v1386, 16
        %v1450 = vshrl.u32 %v1420, 16
        %v1451 = vpack.i.b16 %v1450, %v1449
        %v1453 = vcombine.low %v1423, %v1439
        %v1455 = vunpack.c.l.s4 1983009808
        %v1456 = vunpack.c.0.s8 %v1455
        %v1457 = vlaneseq
        %v1458 = vshrl.u32 %v1457, 7
        %v1459 = vsub.s32 %v1456, %v1458
        %v1460 = vrot.slane %v1453, %v1459
        %v1461 = vcombine.low %v1431, %v1447
        %v1463 = vunpack.c.l.s4 1983009808
        %v1464 = vunpack.c.0.s8 %v1463
        %v1465 = vlaneseq
        %v1466 = vshrl.u32 %v1465, 7
        %v1467 = vsub.s32 %v1464, %v1466
        %v1468 = vrot.slane %v1461, %v1467
        %v1469 = vcombine.low %v1460, %v1468
        %v1471 = vunpack.c.l.s4 1934713408
        %v1472 = vunpack.c.0.s8 %v1471
        %v1473 = vlaneseq
        %v1474 = vshrl.u32 %v1473, 7
        %v1475 = vsub.s32 %v1472, %v1474
        %v1476 = vrot.slane %v1469, %v1475
        %v1477 = vcombine.high %v1476, 0
        %v1478 = vcombine.low %v1427, %v1443
        %v1480 = vunpack.c.l.s4 1983009808
        %v1481 = vunpack.c.0.s8 %v1480
        %v1482 = vlaneseq
        %v1483 = vshrl.u32 %v1482, 7
        %v1484 = vsub.s32 %v1481, %v1483
        %v1485 = vrot.slane %v1478, %v1484
        %v1486 = vcombine.low %v1435, %v1451
        %v1488 = vunpack.c.l.s4 1983009808
        %v1489 = vunpack.c.0.s8 %v1488
        %v1490 = vlaneseq
        %v1491 = vshrl.u32 %v1490, 7
        %v1492 = vsub.s32 %v1489, %v1491
        %v1493 = vrot.slane %v1486, %v1492
        %v1494 = vcombine.low %v1485, %v1493
        %v1496 = vunpack.c.l.s4 1934713408
        %v1497 = vunpack.c.0.s8 %v1496
        %v1498 = vlaneseq
        %v1499 = vshrl.u32 %v1498, 7
        %v1500 = vsub.s32 %v1497, %v1499
        %v1501 = vrot.slane %v1494, %v1500
        %v1502 = vcombine.high %v1501, 0
        %v1505 = vpack.i.b16 %v1501, %v1476
        %v1506 = vshrl.u32 %v1476, 16
        %v1507 = vshrl.u32 %v1501, 16
        %v1508 = vpack.i.b16 %v1507, %v1506
        %v1511 = vpack.i.b16 %v1502, %v1477
        %v1512 = vshrl.u32 %v1477, 16
        %v1513 = vshrl.u32 %v1502, 16
        %v1514 = vpack.i.b16 %v1513, %v1512
        %1515 = vrot.lane.b32.xlu0 %v1508, 8
        %v1516 = vpop.permute.xlu0 %1515
        %1517 = vrot.lane.b32.xlu0 %v1511, 16
        %v1518 = vpop.permute.xlu0 %1517
        %1519 = vrot.lane.b32.xlu0 %v1514, 24
        %v1520 = vpop.permute.xlu0 %1519
        %v1523 = vsel %vm935, %v1505, %v1516
        %vm1524 = vcmask 130048
        %v1526 = vsel %vm1524, %v1523, %v1518
        %vm1527 = vcmask 195584
        %v1529 = vsel %vm1527, %v1526, %v1520
        %v1530 = vld [vmem:[#allocation7] sm:$0xf]
        %v1531 = vld [vmem:[#allocation7 + $0x4] sm:$0xf]
        %v1532 = vld [vmem:[#allocation7 + $0x8] sm:$0xf]
        %v1533 = vld [vmem:[#allocation7 + $0xc] sm:$0xf]
        %v1534 = vld [vmem:[%s5] sm:$0x1]
        %v1536 = vlaneseq
        %v1537 = vshrl.u32 %v1536, 7
        %v1538 = vsub.s32 0, %v1537
        %v1539 = vrot.slane %v1534, %v1538
        %v1545 = vunpack.c.l.b16 %v1530
        %v1546 = vunpack.c.l.b16 %v1531
        %v1547 = vunpack.c.l.b16 %v1532
        %v1548 = vunpack.c.l.b16 %v1533
        %v1549 = vpack.c.b16 %v1546, %v1545
        %v1550 = vpack.c.b16 %v1548, %v1547
        %v1553 = vsel %vm371, %v1529, 0
        %1555 = vmatprep.subr.bf16.mxu0 0
        %1556 = vmatpush1.bf16.msra.mxu0 %v1549
        %1557 = vmatprep.subr.bf16.mxu0 0
        %1558 = vmatpush1.bf16.msra.mxu0 %v1550
        %1559 = vmatprep.subr.bf16.mxu0 0
        %1560 = vmatpush1.bf16.msra.mxu0 0
        %1561 = vmatprep.subr.bf16.mxu0 0
        %1562 = vmatpush1.bf16.msra.mxu0 0
        %1563 = vmatprep.subr.bf16.mxu0 0
        %1564 = vmatpush1.bf16.msra.mxu0 0
        %1565 = vmatprep.subr.bf16.mxu0 0
        %1566 = vmatpush1.bf16.msra.mxu0 0
        %1567 = vmatprep.subr.bf16.mxu0 0
        %1568 = vmatpush1.bf16.msra.mxu0 0
        %1569 = vmatprep.subr.bf16.mxu0 0
        %1570 = vmatpush1.bf16.msra.mxu0 0
        %1571 = vmatprep.subr.bf16.mxu0 0
        %1572 = vmatpush1.bf16.msra.mxu0 0
        %1573 = vmatprep.subr.bf16.mxu0 0
        %1574 = vmatpush1.bf16.msra.mxu0 0
        %1575 = vmatprep.subr.bf16.mxu0 0
        %1576 = vmatpush1.bf16.msra.mxu0 0
        %1577 = vmatprep.subr.bf16.mxu0 0
        %1578 = vmatpush1.bf16.msra.mxu0 0
        %1579 = vmatprep.subr.bf16.mxu0 0
        %1580 = vmatpush1.bf16.msra.mxu0 0
        %1581 = vmatprep.subr.bf16.mxu0 0
        %1582 = vmatpush1.bf16.msra.mxu0 0
        %1583 = vmatprep.subr.bf16.mxu0 0
        %1584 = vmatpush1.bf16.msra.mxu0 0
        %1585 = vmatprep.subr.bf16.mxu0 0
        %1586 = vmatpush1.bf16.msra.mxu0 0
        %1587 = vmatprep.mubr.bf16.mxu0 0
        %1588 = vmatmul.mubr.bf16.gmra.mrb[0].mxu0 %v1553
        %v1589 = vpop.f32.mrb[0].mxu0
        %v1590 = vadd.f32 %v1539, %v1589
        %v1591 = vpop.f32.mrb[0].mxu0
        %v1592 = vpop.f32.mrb[0].mxu0
        %v1593 = vpop.f32.mrb[0].mxu0
        %1594 = vdwg.mxu0
        %v1595 = vadd.f32 %v365, %v1590
        %1596 = vst.msk [vmem:[%s360] sm:$0xff] %vm371, %v1595
        %s1597 = sand.u32 %s212, 1
        %s1598 = scalar_lea.sflag [#allocation4], %s1597
        %s1599 = sand.u32 %s212, 1
        %s1600 = smul.addr %s1599, 8
        %s1601 = scalar_lea.vmem [#allocation8], %s1600
        // Predicated region
        $region65: #{tpu_custom_call.1} parent=51 // pred_check
          %p1602 = pneg %p222
        $region66: #{tpu_custom_call.1} parent=51 // pred_check_branch
          %1604 = sbr.rel (%p1602) target = $region68
        $region67: #{tpu_custom_call.1} parent=51 // pred_region
          %s1606 = ssub.s32 128, 128
          %1607 = vsyncadd %s1598, %s1606
          %s1608 = smul.addr %s26, 128
          %s1609 = scalar_lea.hbm %s8, %s1608
          %s1611 = sshll.u32 %s1601, 4
          %s1612 = int_to_ptr.vmem [resolvable:$true] %s1611
          %1614 = dma.vmem_to_hbm [thread:$0]  %s1612, 128, %s1609, %s1598
        $region68: #{tpu_custom_call.1} parent=51 // pred_fallthru
          _
      $region52: #{tpu_custom_call.1} parent=5 // pred_fallthru
        _
      %p1615 = scmp.le.s32.totalorder 2, %s21
      // Predicated region
      $region69: #{tpu_custom_call.1} parent=5 // pred_check
        %p1616 = pneg %p1615
      $region70: #{tpu_custom_call.1} parent=5 // pred_check_branch
        %1618 = sbr.rel (%p1616) target = $region72
      $region71: #{tpu_custom_call.1} parent=5 // pred_region
        %s1619 = ssub.s32 %s21, 2
        // Predicated region
        $region73: #{tpu_custom_call.1} parent=71 // pred_check
          %p1620 = pneg %p228
        $region74: #{tpu_custom_call.1} parent=71 // pred_check_branch
          %1622 = sbr.rel (%p1620) target = $region76
        $region75: #{tpu_custom_call.1} parent=71 // pred_region
          %s1623 = sand.u32 %s213, 1
          %s1624 = scalar_lea.sflag [#allocation4], %s1623
          %s1625 = sand.u32 %s213, 1
          %s1626 = smul.addr %s1625, 8
          %s1627 = scalar_lea.vmem [#allocation8], %s1626
          %1628 = dma.done %s1624, 128
        $region76: #{tpu_custom_call.1} parent=71 // pred_fallthru
          _
      $region72: #{tpu_custom_call.1} parent=5 // pred_fallthru
        _
    $region6: #{tpu_custom_call.1} parent=1 // loop_footer
      %s25 = sadd.s32 1, %s21
    $region7: #{tpu_custom_call.1} parent=1 // loop_footer_branch
      %20 = sbr.rel target = $region3
    $region8: #{tpu_custom_call.1} parent=1 // loop_exit
      _
    %1629 = vsyncpa [#allocation3], 1
    %s1630 = scalar_lea.sflag [#allocation3], 1
    %1631 = vsyncpa %s1630, 1
    %1632 = vsyncpa [#allocation6], 1
    %1633 = vsyncpa [#allocation4], 1
    %s1634 = scalar_lea.sflag [#allocation4], 1
    %1635 = vsyncpa %s1634, 1

</llo_original>
